<compile_context>
chip_gen: v7x
topology: tpu7x:2x2x1
jax: 0.10.0
libtpu: 0.0.40
codegen_flags: <defaults>
</compile_context>

<pallas_src>
import jax
import jax.numpy as jnp
import numpy as np
from jax.experimental import pallas as pl
from jax.experimental.pallas import tpu as pltpu


def _round_up(n, m):
    return ((n + m - 1) // m) * m


def _mish_host(x):
    # exact Mish for the (wrapper-side) time MLP
    return x * jnp.tanh(jax.nn.softplus(x))


# ----------------------------------------------------------------------------
# Pallas kernel: whole forward pass fused, TB batch elements per grid step.
# ----------------------------------------------------------------------------
def _make_kernel(TB, H, K, Cp_in, Cp_out, cg, eps=1e-5):
    pad = K // 2
    inv_n = 1.0 / float(cg * H)          # elements per GroupNorm group (real channels)

    def mish(x):
        # x * tanh(softplus(x)) with one exp + one EUP reciprocal:
        #   e = exp(x); mish = x * e*(e+2) / (e*(e+2) + 2)
        e = jnp.exp(jnp.minimum(x, 20.0))
        w = e * (e + 2.0)
        return x * w * pl.reciprocal(w + 2.0, approx=True)

    def kernel(xpad_ref, tm_ref,
               w1_ref, b1_ref, g1_ref, be1_ref,      # Conv1dBlock 1
               w2_ref, b2_ref, g2_ref, be2_ref,      # Conv1dBlock 2
               wr_ref, br_ref,                       # residual 1x1 conv
               mg_ref,                               # group-membership matrix (bf16 0/1)
               o_ref):                               # output block
        mg = mg_ref[...].astype(jnp.float32)         # (Cp_out, Cp_out)

        def group_norm(y, gamma, beta):
            # y: (TB, H, Cp_out); per-batch stats over (group channels x horizon).
            # Two-pass variance (no E[x^2]-E[x]^2 cancellation).  Stat dots kept f32.
            s = jnp.sum(y, axis=1)                                        # (TB, Cp)
            mean = jnp.dot(s, mg, preferred_element_type=jnp.float32) * inv_n
            d = y - mean[:, None, :]
            q = jnp.sum(d * d, axis=1)                                    # (TB, Cp)
            var = jnp.dot(q, mg, preferred_element_type=jnp.float32) * inv_n
            return d * jax.lax.rsqrt(var + eps)[:, None, :] * gamma + beta

        def conv_from_ref(src_ref, w_ref, b, C_src):
            # "same" conv as K accumulating bf16 MXU dots; shifted views are read
            # straight from the (halo-padded) ref at their use sites.
            acc = jnp.zeros((TB * H, Cp_out), jnp.float32)
            for k in range(K):
                lhs = src_ref[:, k:k + H, :].astype(jnp.bfloat16).reshape(TB * H, C_src)
                acc = acc + jnp.dot(lhs, w_ref[k], preferred_element_type=jnp.float32)
            return acc.reshape(TB, H, Cp_out) + b

        def conv_from_val(src, w_ref, b, C_src):
            acc = jnp.zeros((TB * H, Cp_out), jnp.float32)
            for k in range(K):
                lhs = src[:, k:k + H, :].reshape(TB * H, C_src)
                acc = acc + jnp.dot(lhs, w_ref[k], preferred_element_type=jnp.float32)
            return acc.reshape(TB, H, Cp_out) + b

        # ---- Conv1dBlock #1 : conv -> GroupNorm -> Mish --------------------
        y = mish(group_norm(conv_from_ref(xpad_ref, w1_ref, b1_ref[...], Cp_in),
                            g1_ref[...], be1_ref[...]))

        # ---- + time embedding (precomputed in wrapper), broadcast over H ---
        y = y + tm_ref[...].astype(jnp.float32)       # (TB,1,Cp) -> broadcast

        # ---- Conv1dBlock #2 (bf16 padded input via zero-row concat) --------
        zrow = jnp.zeros((TB, pad, Cp_out), jnp.bfloat16)
        ypad = jnp.concatenate([zrow, y.astype(jnp.bfloat16), zrow], axis=1)
        y = mish(group_norm(conv_from_val(ypad, w2_ref, b2_ref[...], Cp_out),
                            g2_ref[...], be2_ref[...]))

        # ---- residual 1x1 conv ---------------------------------------------
        res = jnp.dot(
            xpad_ref[:, pad:pad + H, :].astype(jnp.bfloat16).reshape(TB * H, Cp_in),
            wr_ref[...], preferred_element_type=jnp.float32).reshape(TB, H, Cp_out)

        o_ref[...] = (y + res + br_ref[...]).astype(o_ref.dtype)

    return kernel


def _pick_batch_block(B, H, Hp, Cp_in, Cp_out, budget=12 * 2**20):
    """Largest divisor TB of B such that (a) at least min(B,4) grid steps remain
    (megacore work on v7x, DMA/compute overlap on v5e) and (b) the per-step
    activation/temporary footprint stays within `budget`."""
    min_steps = 4 if B >= 4 else max(1, min(B, 2))
    best = 1
    for tb in range(1, B + 1):
        if B % tb or (B // tb) < min_steps:
            continue
        per_step = 4 * tb * (2 * Hp * Cp_in + 4 * H * Cp_out + 2 * (H + 8) * Cp_out)
        if per_step > budget:
            continue
        best = max(best, tb)
    return best


# ----------------------------------------------------------------------------
# Wrapper
# ----------------------------------------------------------------------------
def residual_temporal_block(x, t, kp, *, kernel_size=5, n_groups=8, batch_block=None):
    """x: [B, C_in, H] (PyTorch NCL), t: [B, E] -> [B, C_out, H]."""
    B, C_in, H = x.shape
    K = kernel_size
    pad = K // 2
    Hp = H + 2 * pad
    _, Cp_in, Cp_out = kp["w1"].shape
    C_out = kp["c_out"]
    cg = C_out // n_groups

    # --- wrapper-side glue (fused by XLA) ------------------------------------
    # Time MLP hoisted out of the kernel: one well-shaped (B,E)@(E,Cp) matmul.
    tm = (_mish_host(t.astype(jnp.float32)) @ kp["wt"] + kp["bt"])[:, None, :]  # (B,1,Cp)
    # NCL -> NLC; single pad: channels up to the 128-lane width + horizon halo.
    x_hc = jnp.transpose(x, (0, 2, 1))                                       # (B,H,C_in)
    x_pad = jnp.pad(x_hc, ((0, 0), (pad, pad), (0, Cp_in - C_in)))           # (B,Hp,Cp_in)

    TB = batch_block or _pick_batch_block(B, H, Hp, Cp_in, Cp_out)
    assert B % TB == 0, "batch_block must divide the batch size"
    grid = (B // TB,)

    def const_spec(shape):
        nd = len(shape)
        return pl.BlockSpec(shape, lambda b, _nd=nd: (0,) * _nd,
                            pipeline_mode=pl.Buffered(1))   # constant-index: 1 buffer

    # --- realistic VMEM budget -------------------------------------------------
    f32, bf16 = 4, 2
    # pipelined (double-buffered) activation blocks:
    act = 2 * TB * (Hp * Cp_in * f32 + Cp_out * f32 + H * Cp_out * f32)
    # single-buffered weights / constants:
    wgt = ((K * Cp_in + K * Cp_out + Cp_in + Cp_out) * Cp_out * bf16
           + 7 * 8 * Cp_out * f32)
    # in-kernel temporaries: bf16 tap views, y/d/res f32, bf16 padded conv-2 input.
    tmp = TB * (Hp * Cp_in * bf16 + (H + 2 * pad) * Cp_out * bf16
                + 4 * H * Cp_out * f32)
    vmem_limit = int(min(max(int(1.3 * (act + wgt + tmp)), 16 * 2**20), 40 * 2**20))

    kernel = _make_kernel(TB, H, K, Cp_in, Cp_out, cg)

    out = pl.pallas_call(
        kernel,
        out_shape=jax.ShapeDtypeStruct((B, H, Cp_out), x.dtype),
        grid=grid,
        in_specs=[
            pl.BlockSpec((TB, Hp, Cp_in), lambda b: (b, 0, 0)),     # x (padded)
            pl.BlockSpec((TB, 1, Cp_out), lambda b: (b, 0, 0)),     # time embedding
            const_spec((K, Cp_in, Cp_out)), const_spec((1, Cp_out)),
            const_spec((1, Cp_out)), const_spec((1, Cp_out)),
            const_spec((K, Cp_out, Cp_out)), const_spec((1, Cp_out)),
            const_spec((1, Cp_out)), const_spec((1, Cp_out)),
            const_spec((Cp_in, Cp_out)), const_spec((1, Cp_out)),
            const_spec((Cp_out, Cp_out)),
        ],
        out_specs=pl.BlockSpec((TB, H, Cp_out), lambda b: (b, 0, 0)),
        compiler_params=pltpu.CompilerParams(
            dimension_semantics=("parallel",),
            vmem_limit_bytes=vmem_limit),
    )(x_pad, tm,
      kp["w1"], kp["b1"], kp["g1"], kp["be1"],
      kp["w2"], kp["b2"], kp["g2"], kp["be2"],
      kp["wr"], kp["br"], kp["mg"])

    # drop channel padding, back to NCL
    return jnp.transpose(out[:, :, :C_out], (0, 2, 1))


# ----------------------------------------------------------------------------
# Parameter preparation: PyTorch-layout -> kernel-layout (transposed, lane-padded)
# ----------------------------------------------------------------------------
def prepare_params(P, *, kernel_size=5, n_groups=8, lane=128):
    C_out, C_in, K = P["W1"].shape
    assert K == kernel_size
    Cp_in = _round_up(C_in, lane)
    Cp_out = _round_up(C_out, lane)

    def padto(a, sizes):
        return jnp.pad(a, [(0, s - d) for d, s in zip(a.shape, sizes)])

    def row(name):
        return padto(P[name][None, :], (1, Cp_out))

    # conv weights: (C_out, C_in, K) -> (K, C_in, C_out), lane-padded, bf16 (MXU-native)
    w1 = padto(jnp.transpose(P["W1"], (2, 1, 0)), (K, Cp_in, Cp_out)).astype(jnp.bfloat16)
    w2 = padto(jnp.transpose(P["W2"], (2, 1, 0)), (K, Cp_out, Cp_out)).astype(jnp.bfloat16)
    wt = padto(P["WT"].T, (P["WT"].shape[1], Cp_out))            # time MLP stays f32 (XLA)
    if "WR" in P:
        wr = padto(P["WR"][:, :, 0].T, (Cp_in, Cp_out)).astype(jnp.bfloat16)
        br = row("BR")
    else:  # residual is nn.Identity when C_in == C_out
        wr = padto(jnp.eye(C_in, dtype=jnp.float32), (Cp_in, Cp_out)).astype(jnp.bfloat16)
        br = jnp.zeros((1, Cp_out), jnp.float32)

    # group-membership matrix (padded channels belong to no group); 0/1 exact in bf16
    cg = C_out // n_groups
    idx = np.arange(Cp_out)
    mg = ((idx[:, None] // cg == idx[None, :] // cg)
          & (idx[:, None] < C_out) & (idx[None, :] < C_out)).astype(np.float32)

    return {
        "c_out": C_out,
        "w1": w1, "b1": row("B1"), "g1": row("G1"), "be1": row("BE1"),
        "w2": w2, "b2": row("B2"), "g2": row("G2"), "be2": row("BE2"),
        "wt": wt, "bt": row("BT"),
        "wr": wr, "br": br,
        "mg": jnp.asarray(mg, jnp.bfloat16),
    }


# ----------------------------------------------------------------------------
# Pure-JAX reference (PyTorch-layout weights, f32) for verification
# ----------------------------------------------------------------------------
def reference(x, t, P, *, kernel_size=5, n_groups=8, eps=1e-5):
    pad = kernel_size // 2

    def conv1d(x, w, b, p):
        y = jax.lax.conv_general_dilated(
            x, w, window_strides=(1,), padding=[(p, p)],
            dimension_numbers=("NCH", "OIH", "NCH"))
        return y + b[None, :, None]

    def gn(y, gamma, beta):
        B, C, H = y.shape
        yg = y.reshape(B, n_groups, (C // n_groups) * H)
        m = yg.mean(-1, keepdims=True)
        v = yg.var(-1, keepdims=True)
        yn = ((yg - m) / jnp.sqrt(v + eps)).reshape(B, C, H)
        return yn * gamma[None, :, None] + beta[None, :, None]

    def block(x, w, b, g, be):
        return _mish_host(gn(conv1d(x, w, b, pad), g, be))

    out = block(x, P["W1"], P["B1"], P["G1"], P["BE1"])
    tm = _mish_host(t) @ P["WT"].T + P["BT"]
    out = out + tm[:, :, None]
    out = block(out, P["W2"], P["B2"], P["G2"], P["BE2"])
    res = conv1d(x, P["WR"], P["BR"], 0)
    return out + res


# ----------------------------------------------------------------------------
def init_torch_params(key, C_in, C_out, E, K):
    ks = jax.random.split(key, 12)
    return {
        "W1": jax.random.normal(ks[0], (C_out, C_in, K), jnp.float32) * 0.2,
        "B1": jax.random.normal(ks[1], (C_out,), jnp.float32) * 0.1,
        "G1": 1.0 + 0.1 * jax.random.normal(ks[2], (C_out,), jnp.float32),
        "BE1": 0.1 * jax.random.normal(ks[3], (C_out,), jnp.float32),
        "WT": jax.random.normal(ks[4], (C_out, E), jnp.float32) * 0.2,
        "BT": jax.random.normal(ks[5], (C_out,), jnp.float32) * 0.1,
        "W2": jax.random.normal(ks[6], (C_out, C_out, K), jnp.float32) * 0.2,
        "B2": jax.random.normal(ks[7], (C_out,), jnp.float32) * 0.1,
        "G2": 1.0 + 0.1 * jax.random.normal(ks[8], (C_out,), jnp.float32),
        "BE2": 0.1 * jax.random.normal(ks[9], (C_out,), jnp.float32),
        "WR": jax.random.normal(ks[10], (C_out, C_in, 1), jnp.float32) * 0.2,
        "BR": jax.random.normal(ks[11], (C_out,), jnp.float32) * 0.1,
    }


if __name__ == "__main__":
    B, C_in, C_out, E, H, K, G = 2, 4, 16, 8, 16, 5, 8

    key = jax.random.PRNGKey(0)
    kx, kt, kparam = jax.random.split(key, 3)
    x = jax.random.normal(kx, (B, C_in, H), jnp.float32)
    t = jax.random.normal(kt, (B, E), jnp.float32)

    P = init_torch_params(kparam, C_in, C_out, E, K)
    KP = prepare_params(P, kernel_size=K, n_groups=G)

    out = residual_temporal_block(x, t, KP, kernel_size=K, n_groups=G)
    out = jax.block_until_ready(out)

    ref = reference(x, t, P, kernel_size=K, n_groups=G)
    # tolerance loosened for bf16 MXU operands + approx-reciprocal Mish
    np.testing.assert_allclose(np.asarray(out), np.asarray(ref),
                               rtol=5e-2, atol=5e-2)
    assert out.shape == (B, C_out, H)
    print("KERNEL_OK")
</pallas_src>

<mosaic_0001>
module attributes {stable_mosaic.version = 11 : i64} {
  func.func @kernel(%arg0: i32, %arg1: memref<1x20x128xf32, #tpu.memory_space<vmem>>, %arg2: memref<1x1x128xf32, #tpu.memory_space<vmem>>, %arg3: memref<5x128x128xbf16, #tpu.memory_space<vmem>>, %arg4: memref<1x128xf32, #tpu.memory_space<vmem>>, %arg5: memref<1x128xf32, #tpu.memory_space<vmem>>, %arg6: memref<1x128xf32, #tpu.memory_space<vmem>>, %arg7: memref<5x128x128xbf16, #tpu.memory_space<vmem>>, %arg8: memref<1x128xf32, #tpu.memory_space<vmem>>, %arg9: memref<1x128xf32, #tpu.memory_space<vmem>>, %arg10: memref<1x128xf32, #tpu.memory_space<vmem>>, %arg11: memref<128x128xbf16, #tpu.memory_space<vmem>>, %arg12: memref<1x128xf32, #tpu.memory_space<vmem>>, %arg13: memref<128x128xbf16, #tpu.memory_space<vmem>>, %arg14: memref<1x16x128xf32, #tpu.memory_space<vmem>>) attributes {dimension_semantics = [#tpu.dimension_semantics<parallel>], iteration_bounds = array<i64: 2>, scalar_prefetch = 0 : i64, scratch_operands = 0 : i64, tpu.core_type = #tpu.core_type<tc>, window_params = [{transform_indices = @transform_0, window_bounds = array<i64: 1, 20, 128>}, {transform_indices = @transform_1, window_bounds = array<i64: 1, 1, 128>}, {pipeline_mode = #tpu.pipeline_mode<synchronous>, transform_indices = @transform_2, window_bounds = array<i64: 5, 128, 128>}, {pipeline_mode = #tpu.pipeline_mode<synchronous>, transform_indices = @transform_3, window_bounds = array<i64: 1, 128>}, {pipeline_mode = #tpu.pipeline_mode<synchronous>, transform_indices = @transform_4, window_bounds = array<i64: 1, 128>}, {pipeline_mode = #tpu.pipeline_mode<synchronous>, transform_indices = @transform_5, window_bounds = array<i64: 1, 128>}, {pipeline_mode = #tpu.pipeline_mode<synchronous>, transform_indices = @transform_6, window_bounds = array<i64: 5, 128, 128>}, {pipeline_mode = #tpu.pipeline_mode<synchronous>, transform_indices = @transform_7, window_bounds = array<i64: 1, 128>}, {pipeline_mode = #tpu.pipeline_mode<synchronous>, transform_indices = @transform_8, window_bounds = array<i64: 1, 128>}, {pipeline_mode = #tpu.pipeline_mode<synchronous>, transform_indices = @transform_9, window_bounds = array<i64: 1, 128>}, {pipeline_mode = #tpu.pipeline_mode<synchronous>, transform_indices = @transform_10, window_bounds = array<i64: 128, 128>}, {pipeline_mode = #tpu.pipeline_mode<synchronous>, transform_indices = @transform_11, window_bounds = array<i64: 1, 128>}, {pipeline_mode = #tpu.pipeline_mode<synchronous>, transform_indices = @transform_12, window_bounds = array<i64: 128, 128>}, {transform_indices = @transform_13, window_bounds = array<i64: 1, 16, 128>}]} {
    %c0 = arith.constant 0 : index
    %c0_0 = arith.constant 0 : index
    %0 = vector.load %arg13[%c0, %c0_0] : memref<128x128xbf16, #tpu.memory_space<vmem>>, vector<128x128xbf16>
    %1 = arith.extf %0 : vector<128x128xbf16> to vector<128x128xf32>
    %c0_1 = arith.constant 0 : index
    %c0_2 = arith.constant 0 : index
    %2 = vector.load %arg4[%c0_1, %c0_2] : memref<1x128xf32, #tpu.memory_space<vmem>>, vector<1x128xf32>
    %cst = arith.constant 0.000000e+00 : f32
    %3 = vector.broadcast %cst : f32 to vector<16x128xf32>
    %c0_3 = arith.constant 0 : index
    %c0_4 = arith.constant 0 : index
    %c0_5 = arith.constant 0 : index
    %4 = vector.load %arg1[%c0_3, %c0_4, %c0_5] : memref<1x20x128xf32, #tpu.memory_space<vmem>>, vector<1x16x128xf32>
    %5 = arith.truncf %4 : vector<1x16x128xf32> to vector<1x16x128xbf16>
    %6 = vector.shape_cast %5 : vector<1x16x128xbf16> to vector<16x128xbf16>
    %c0_6 = arith.constant 0 : index
    %c0_7 = arith.constant 0 : index
    %c0_8 = arith.constant 0 : index
    %7 = vector.load %arg3[%c0_6, %c0_7, %c0_8] : memref<5x128x128xbf16, #tpu.memory_space<vmem>>, vector<1x128x128xbf16>
    %8 = vector.shape_cast %7 : vector<1x128x128xbf16> to vector<128x128xbf16>
    %cst_9 = arith.constant dense<0.000000e+00> : vector<16x128xf32>
    %9 = tpu.matmul %6, %8, %cst_9 {dimension_numbers = #tpu.dot_dimension_numbers<[1], [0], [0], [1], [0, 0, 1, 1], [], []>} : vector<16x128xbf16>, vector<128x128xbf16>, vector<16x128xf32> -> vector<16x128xf32>
    %10 = arith.addf %3, %9 : vector<16x128xf32>
    %c0_10 = arith.constant 0 : index
    %c1 = arith.constant 1 : index
    %c0_11 = arith.constant 0 : index
    %11 = vector.load %arg1[%c0_10, %c1, %c0_11] : memref<1x20x128xf32, #tpu.memory_space<vmem>>, vector<1x16x128xf32>
    %12 = arith.truncf %11 : vector<1x16x128xf32> to vector<1x16x128xbf16>
    %13 = vector.shape_cast %12 : vector<1x16x128xbf16> to vector<16x128xbf16>
    %c1_12 = arith.constant 1 : index
    %c0_13 = arith.constant 0 : index
    %c0_14 = arith.constant 0 : index
    %14 = vector.load %arg3[%c1_12, %c0_13, %c0_14] : memref<5x128x128xbf16, #tpu.memory_space<vmem>>, vector<1x128x128xbf16>
    %15 = vector.shape_cast %14 : vector<1x128x128xbf16> to vector<128x128xbf16>
    %cst_15 = arith.constant dense<0.000000e+00> : vector<16x128xf32>
    %16 = tpu.matmul %13, %15, %cst_15 {dimension_numbers = #tpu.dot_dimension_numbers<[1], [0], [0], [1], [0, 0, 1, 1], [], []>} : vector<16x128xbf16>, vector<128x128xbf16>, vector<16x128xf32> -> vector<16x128xf32>
    %17 = arith.addf %10, %16 : vector<16x128xf32>
    %c0_16 = arith.constant 0 : index
    %c2 = arith.constant 2 : index
    %c0_17 = arith.constant 0 : index
    %18 = vector.load %arg1[%c0_16, %c2, %c0_17] : memref<1x20x128xf32, #tpu.memory_space<vmem>>, vector<1x16x128xf32>
    %19 = arith.truncf %18 : vector<1x16x128xf32> to vector<1x16x128xbf16>
    %20 = vector.shape_cast %19 : vector<1x16x128xbf16> to vector<16x128xbf16>
    %c2_18 = arith.constant 2 : index
    %c0_19 = arith.constant 0 : index
    %c0_20 = arith.constant 0 : index
    %21 = vector.load %arg3[%c2_18, %c0_19, %c0_20] : memref<5x128x128xbf16, #tpu.memory_space<vmem>>, vector<1x128x128xbf16>
    %22 = vector.shape_cast %21 : vector<1x128x128xbf16> to vector<128x128xbf16>
    %cst_21 = arith.constant dense<0.000000e+00> : vector<16x128xf32>
    %23 = tpu.matmul %20, %22, %cst_21 {dimension_numbers = #tpu.dot_dimension_numbers<[1], [0], [0], [1], [0, 0, 1, 1], [], []>} : vector<16x128xbf16>, vector<128x128xbf16>, vector<16x128xf32> -> vector<16x128xf32>
    %24 = arith.addf %17, %23 : vector<16x128xf32>
    %c0_22 = arith.constant 0 : index
    %c3 = arith.constant 3 : index
    %c0_23 = arith.constant 0 : index
    %25 = vector.load %arg1[%c0_22, %c3, %c0_23] : memref<1x20x128xf32, #tpu.memory_space<vmem>>, vector<1x16x128xf32>
    %26 = arith.truncf %25 : vector<1x16x128xf32> to vector<1x16x128xbf16>
    %27 = vector.shape_cast %26 : vector<1x16x128xbf16> to vector<16x128xbf16>
    %c3_24 = arith.constant 3 : index
    %c0_25 = arith.constant 0 : index
    %c0_26 = arith.constant 0 : index
    %28 = vector.load %arg3[%c3_24, %c0_25, %c0_26] : memref<5x128x128xbf16, #tpu.memory_space<vmem>>, vector<1x128x128xbf16>
    %29 = vector.shape_cast %28 : vector<1x128x128xbf16> to vector<128x128xbf16>
    %cst_27 = arith.constant dense<0.000000e+00> : vector<16x128xf32>
    %30 = tpu.matmul %27, %29, %cst_27 {dimension_numbers = #tpu.dot_dimension_numbers<[1], [0], [0], [1], [0, 0, 1, 1], [], []>} : vector<16x128xbf16>, vector<128x128xbf16>, vector<16x128xf32> -> vector<16x128xf32>
    %31 = arith.addf %24, %30 : vector<16x128xf32>
    %c0_28 = arith.constant 0 : index
    %c4 = arith.constant 4 : index
    %c0_29 = arith.constant 0 : index
    %32 = vector.load %arg1[%c0_28, %c4, %c0_29] : memref<1x20x128xf32, #tpu.memory_space<vmem>>, vector<1x16x128xf32>
    %33 = arith.truncf %32 : vector<1x16x128xf32> to vector<1x16x128xbf16>
    %34 = vector.shape_cast %33 : vector<1x16x128xbf16> to vector<16x128xbf16>
    %c4_30 = arith.constant 4 : index
    %c0_31 = arith.constant 0 : index
    %c0_32 = arith.constant 0 : index
    %35 = vector.load %arg3[%c4_30, %c0_31, %c0_32] : memref<5x128x128xbf16, #tpu.memory_space<vmem>>, vector<1x128x128xbf16>
    %36 = vector.shape_cast %35 : vector<1x128x128xbf16> to vector<128x128xbf16>
    %cst_33 = arith.constant dense<0.000000e+00> : vector<16x128xf32>
    %37 = tpu.matmul %34, %36, %cst_33 {dimension_numbers = #tpu.dot_dimension_numbers<[1], [0], [0], [1], [0, 0, 1, 1], [], []>} : vector<16x128xbf16>, vector<128x128xbf16>, vector<16x128xf32> -> vector<16x128xf32>
    %38 = arith.addf %31, %37 : vector<16x128xf32>
    %39 = vector.shape_cast %38 : vector<16x128xf32> to vector<1x16x128xf32>
    %40 = vector.shape_cast %2 : vector<1x128xf32> to vector<1x1x128xf32>
    %41 = vector.broadcast %40 : vector<1x1x128xf32> to vector<1x16x128xf32>
    %42 = arith.addf %39, %41 : vector<1x16x128xf32>
    %c0_34 = arith.constant 0 : index
    %c0_35 = arith.constant 0 : index
    %43 = vector.load %arg5[%c0_34, %c0_35] : memref<1x128xf32, #tpu.memory_space<vmem>>, vector<1x128xf32>
    %c0_36 = arith.constant 0 : index
    %c0_37 = arith.constant 0 : index
    %44 = vector.load %arg6[%c0_36, %c0_37] : memref<1x128xf32, #tpu.memory_space<vmem>>, vector<1x128xf32>
    %cst_38 = arith.constant dense<0.000000e+00> : vector<1x128xf32>
    %45 = vector.multi_reduction <add>, %42, %cst_38 [1] : vector<1x16x128xf32> to vector<1x128xf32>
    %cst_39 = arith.constant dense<0.000000e+00> : vector<1x128xf32>
    %46 = tpu.matmul %45, %1, %cst_39 {dimension_numbers = #tpu.dot_dimension_numbers<[1], [0], [0], [1], [0, 0, 1, 1], [], []>} : vector<1x128xf32>, vector<128x128xf32>, vector<1x128xf32> -> vector<1x128xf32>
    %cst_40 = arith.constant 3.125000e-02 : f32
    %47 = vector.broadcast %cst_40 : f32 to vector<1x128xf32>
    %48 = arith.mulf %46, %47 : vector<1x128xf32>
    %49 = vector.shape_cast %48 : vector<1x128xf32> to vector<1x1x128xf32>
    %50 = vector.broadcast %49 : vector<1x1x128xf32> to vector<1x16x128xf32>
    %51 = arith.subf %42, %50 : vector<1x16x128xf32>
    %52 = arith.mulf %51, %51 : vector<1x16x128xf32>
    %cst_41 = arith.constant dense<0.000000e+00> : vector<1x128xf32>
    %53 = vector.multi_reduction <add>, %52, %cst_41 [1] : vector<1x16x128xf32> to vector<1x128xf32>
    %cst_42 = arith.constant dense<0.000000e+00> : vector<1x128xf32>
    %54 = tpu.matmul %53, %1, %cst_42 {dimension_numbers = #tpu.dot_dimension_numbers<[1], [0], [0], [1], [0, 0, 1, 1], [], []>} : vector<1x128xf32>, vector<128x128xf32>, vector<1x128xf32> -> vector<1x128xf32>
    %cst_43 = arith.constant 3.125000e-02 : f32
    %55 = vector.broadcast %cst_43 : f32 to vector<1x128xf32>
    %56 = arith.mulf %54, %55 : vector<1x128xf32>
    %cst_44 = arith.constant 9.99999974E-6 : f32
    %57 = vector.broadcast %cst_44 : f32 to vector<1x128xf32>
    %58 = arith.addf %56, %57 : vector<1x128xf32>
    %59 = math.rsqrt %58 : vector<1x128xf32>
    %60 = vector.shape_cast %59 : vector<1x128xf32> to vector<1x1x128xf32>
    %61 = vector.broadcast %60 : vector<1x1x128xf32> to vector<1x16x128xf32>
    %62 = arith.mulf %51, %61 : vector<1x16x128xf32>
    %63 = vector.shape_cast %43 : vector<1x128xf32> to vector<1x1x128xf32>
    %64 = vector.broadcast %63 : vector<1x1x128xf32> to vector<1x16x128xf32>
    %65 = arith.mulf %62, %64 : vector<1x16x128xf32>
    %66 = vector.shape_cast %44 : vector<1x128xf32> to vector<1x1x128xf32>
    %67 = vector.broadcast %66 : vector<1x1x128xf32> to vector<1x16x128xf32>
    %68 = arith.addf %65, %67 : vector<1x16x128xf32>
    %cst_45 = arith.constant 2.000000e+01 : f32
    %69 = vector.broadcast %cst_45 : f32 to vector<1x16x128xf32>
    %70 = arith.minimumf %68, %69 : vector<1x16x128xf32>
    %71 = math.exp %70 : vector<1x16x128xf32>
    %cst_46 = arith.constant 2.000000e+00 : f32
    %72 = vector.broadcast %cst_46 : f32 to vector<1x16x128xf32>
    %73 = arith.addf %71, %72 : vector<1x16x128xf32>
    %74 = arith.mulf %71, %73 : vector<1x16x128xf32>
    %75 = arith.mulf %68, %74 : vector<1x16x128xf32>
    %cst_47 = arith.constant 2.000000e+00 : f32
    %76 = vector.broadcast %cst_47 : f32 to vector<1x16x128xf32>
    %77 = arith.addf %74, %76 : vector<1x16x128xf32>
    %78 = tpu.reciprocal %77 {approx = true} : vector<1x16x128xf32> -> vector<1x16x128xf32>
    %79 = arith.mulf %75, %78 : vector<1x16x128xf32>
    %c0_48 = arith.constant 0 : index
    %c0_49 = arith.constant 0 : index
    %c0_50 = arith.constant 0 : index
    %80 = vector.load %arg2[%c0_48, %c0_49, %c0_50] : memref<1x1x128xf32, #tpu.memory_space<vmem>>, vector<1x1x128xf32>
    %81 = vector.broadcast %80 : vector<1x1x128xf32> to vector<1x16x128xf32>
    %82 = arith.addf %79, %81 : vector<1x16x128xf32>
    %cst_51 = arith.constant 0.000000e+00 : bf16
    %83 = vector.broadcast %cst_51 : bf16 to vector<1x2x128xbf16>
    %84 = arith.truncf %82 : vector<1x16x128xf32> to vector<1x16x128xbf16>
    %85 = tpu.concatenate %83, %84, %83 in 1 : vector<1x2x128xbf16>, vector<1x16x128xbf16>, vector<1x2x128xbf16> -> vector<1x20x128xbf16>
    %c0_52 = arith.constant 0 : index
    %c0_53 = arith.constant 0 : index
    %86 = vector.load %arg8[%c0_52, %c0_53] : memref<1x128xf32, #tpu.memory_space<vmem>>, vector<1x128xf32>
    %cst_54 = arith.constant 0.000000e+00 : f32
    %87 = vector.broadcast %cst_54 : f32 to vector<16x128xf32>
    %88 = vector.extract_strided_slice %85 {offsets = [0, 0, 0], sizes = [1, 16, 128], strides = [1, 1, 1]} : vector<1x20x128xbf16> to vector<1x16x128xbf16>
    %89 = vector.shape_cast %88 : vector<1x16x128xbf16> to vector<16x128xbf16>
    %c0_55 = arith.constant 0 : index
    %c0_56 = arith.constant 0 : index
    %c0_57 = arith.constant 0 : index
    %90 = vector.load %arg7[%c0_55, %c0_56, %c0_57] : memref<5x128x128xbf16, #tpu.memory_space<vmem>>, vector<1x128x128xbf16>
    %91 = vector.shape_cast %90 : vector<1x128x128xbf16> to vector<128x128xbf16>
    %cst_58 = arith.constant dense<0.000000e+00> : vector<16x128xf32>
    %92 = tpu.matmul %89, %91, %cst_58 {dimension_numbers = #tpu.dot_dimension_numbers<[1], [0], [0], [1], [0, 0, 1, 1], [], []>} : vector<16x128xbf16>, vector<128x128xbf16>, vector<16x128xf32> -> vector<16x128xf32>
    %93 = arith.addf %87, %92 : vector<16x128xf32>
    %94 = vector.extract_strided_slice %85 {offsets = [0, 1, 0], sizes = [1, 16, 128], strides = [1, 1, 1]} : vector<1x20x128xbf16> to vector<1x16x128xbf16>
    %95 = vector.shape_cast %94 : vector<1x16x128xbf16> to vector<16x128xbf16>
    %c1_59 = arith.constant 1 : index
    %c0_60 = arith.constant 0 : index
    %c0_61 = arith.constant 0 : index
    %96 = vector.load %arg7[%c1_59, %c0_60, %c0_61] : memref<5x128x128xbf16, #tpu.memory_space<vmem>>, vector<1x128x128xbf16>
    %97 = vector.shape_cast %96 : vector<1x128x128xbf16> to vector<128x128xbf16>
    %cst_62 = arith.constant dense<0.000000e+00> : vector<16x128xf32>
    %98 = tpu.matmul %95, %97, %cst_62 {dimension_numbers = #tpu.dot_dimension_numbers<[1], [0], [0], [1], [0, 0, 1, 1], [], []>} : vector<16x128xbf16>, vector<128x128xbf16>, vector<16x128xf32> -> vector<16x128xf32>
    %99 = arith.addf %93, %98 : vector<16x128xf32>
    %100 = vector.extract_strided_slice %85 {offsets = [0, 2, 0], sizes = [1, 16, 128], strides = [1, 1, 1]} : vector<1x20x128xbf16> to vector<1x16x128xbf16>
    %101 = vector.shape_cast %100 : vector<1x16x128xbf16> to vector<16x128xbf16>
    %c2_63 = arith.constant 2 : index
    %c0_64 = arith.constant 0 : index
    %c0_65 = arith.constant 0 : index
    %102 = vector.load %arg7[%c2_63, %c0_64, %c0_65] : memref<5x128x128xbf16, #tpu.memory_space<vmem>>, vector<1x128x128xbf16>
    %103 = vector.shape_cast %102 : vector<1x128x128xbf16> to vector<128x128xbf16>
    %cst_66 = arith.constant dense<0.000000e+00> : vector<16x128xf32>
    %104 = tpu.matmul %101, %103, %cst_66 {dimension_numbers = #tpu.dot_dimension_numbers<[1], [0], [0], [1], [0, 0, 1, 1], [], []>} : vector<16x128xbf16>, vector<128x128xbf16>, vector<16x128xf32> -> vector<16x128xf32>
    %105 = arith.addf %99, %104 : vector<16x128xf32>
    %106 = vector.extract_strided_slice %85 {offsets = [0, 3, 0], sizes = [1, 16, 128], strides = [1, 1, 1]} : vector<1x20x128xbf16> to vector<1x16x128xbf16>
    %107 = vector.shape_cast %106 : vector<1x16x128xbf16> to vector<16x128xbf16>
    %c3_67 = arith.constant 3 : index
    %c0_68 = arith.constant 0 : index
    %c0_69 = arith.constant 0 : index
    %108 = vector.load %arg7[%c3_67, %c0_68, %c0_69] : memref<5x128x128xbf16, #tpu.memory_space<vmem>>, vector<1x128x128xbf16>
    %109 = vector.shape_cast %108 : vector<1x128x128xbf16> to vector<128x128xbf16>
    %cst_70 = arith.constant dense<0.000000e+00> : vector<16x128xf32>
    %110 = tpu.matmul %107, %109, %cst_70 {dimension_numbers = #tpu.dot_dimension_numbers<[1], [0], [0], [1], [0, 0, 1, 1], [], []>} : vector<16x128xbf16>, vector<128x128xbf16>, vector<16x128xf32> -> vector<16x128xf32>
    %111 = arith.addf %105, %110 : vector<16x128xf32>
    %112 = vector.extract_strided_slice %85 {offsets = [0, 4, 0], sizes = [1, 16, 128], strides = [1, 1, 1]} : vector<1x20x128xbf16> to vector<1x16x128xbf16>
    %113 = vector.shape_cast %112 : vector<1x16x128xbf16> to vector<16x128xbf16>
    %c4_71 = arith.constant 4 : index
    %c0_72 = arith.constant 0 : index
    %c0_73 = arith.constant 0 : index
    %114 = vector.load %arg7[%c4_71, %c0_72, %c0_73] : memref<5x128x128xbf16, #tpu.memory_space<vmem>>, vector<1x128x128xbf16>
    %115 = vector.shape_cast %114 : vector<1x128x128xbf16> to vector<128x128xbf16>
    %cst_74 = arith.constant dense<0.000000e+00> : vector<16x128xf32>
    %116 = tpu.matmul %113, %115, %cst_74 {dimension_numbers = #tpu.dot_dimension_numbers<[1], [0], [0], [1], [0, 0, 1, 1], [], []>} : vector<16x128xbf16>, vector<128x128xbf16>, vector<16x128xf32> -> vector<16x128xf32>
    %117 = arith.addf %111, %116 : vector<16x128xf32>
    %118 = vector.shape_cast %117 : vector<16x128xf32> to vector<1x16x128xf32>
    %119 = vector.shape_cast %86 : vector<1x128xf32> to vector<1x1x128xf32>
    %120 = vector.broadcast %119 : vector<1x1x128xf32> to vector<1x16x128xf32>
    %121 = arith.addf %118, %120 : vector<1x16x128xf32>
    %c0_75 = arith.constant 0 : index
    %c0_76 = arith.constant 0 : index
    %122 = vector.load %arg9[%c0_75, %c0_76] : memref<1x128xf32, #tpu.memory_space<vmem>>, vector<1x128xf32>
    %c0_77 = arith.constant 0 : index
    %c0_78 = arith.constant 0 : index
    %123 = vector.load %arg10[%c0_77, %c0_78] : memref<1x128xf32, #tpu.memory_space<vmem>>, vector<1x128xf32>
    %cst_79 = arith.constant dense<0.000000e+00> : vector<1x128xf32>
    %124 = vector.multi_reduction <add>, %121, %cst_79 [1] : vector<1x16x128xf32> to vector<1x128xf32>
    %cst_80 = arith.constant dense<0.000000e+00> : vector<1x128xf32>
    %125 = tpu.matmul %124, %1, %cst_80 {dimension_numbers = #tpu.dot_dimension_numbers<[1], [0], [0], [1], [0, 0, 1, 1], [], []>} : vector<1x128xf32>, vector<128x128xf32>, vector<1x128xf32> -> vector<1x128xf32>
    %cst_81 = arith.constant 3.125000e-02 : f32
    %126 = vector.broadcast %cst_81 : f32 to vector<1x128xf32>
    %127 = arith.mulf %125, %126 : vector<1x128xf32>
    %128 = vector.shape_cast %127 : vector<1x128xf32> to vector<1x1x128xf32>
    %129 = vector.broadcast %128 : vector<1x1x128xf32> to vector<1x16x128xf32>
    %130 = arith.subf %121, %129 : vector<1x16x128xf32>
    %131 = arith.mulf %130, %130 : vector<1x16x128xf32>
    %cst_82 = arith.constant dense<0.000000e+00> : vector<1x128xf32>
    %132 = vector.multi_reduction <add>, %131, %cst_82 [1] : vector<1x16x128xf32> to vector<1x128xf32>
    %cst_83 = arith.constant dense<0.000000e+00> : vector<1x128xf32>
    %133 = tpu.matmul %132, %1, %cst_83 {dimension_numbers = #tpu.dot_dimension_numbers<[1], [0], [0], [1], [0, 0, 1, 1], [], []>} : vector<1x128xf32>, vector<128x128xf32>, vector<1x128xf32> -> vector<1x128xf32>
    %cst_84 = arith.constant 3.125000e-02 : f32
    %134 = vector.broadcast %cst_84 : f32 to vector<1x128xf32>
    %135 = arith.mulf %133, %134 : vector<1x128xf32>
    %cst_85 = arith.constant 9.99999974E-6 : f32
    %136 = vector.broadcast %cst_85 : f32 to vector<1x128xf32>
    %137 = arith.addf %135, %136 : vector<1x128xf32>
    %138 = math.rsqrt %137 : vector<1x128xf32>
    %139 = vector.shape_cast %138 : vector<1x128xf32> to vector<1x1x128xf32>
    %140 = vector.broadcast %139 : vector<1x1x128xf32> to vector<1x16x128xf32>
    %141 = arith.mulf %130, %140 : vector<1x16x128xf32>
    %142 = vector.shape_cast %122 : vector<1x128xf32> to vector<1x1x128xf32>
    %143 = vector.broadcast %142 : vector<1x1x128xf32> to vector<1x16x128xf32>
    %144 = arith.mulf %141, %143 : vector<1x16x128xf32>
    %145 = vector.shape_cast %123 : vector<1x128xf32> to vector<1x1x128xf32>
    %146 = vector.broadcast %145 : vector<1x1x128xf32> to vector<1x16x128xf32>
    %147 = arith.addf %144, %146 : vector<1x16x128xf32>
    %cst_86 = arith.constant 2.000000e+01 : f32
    %148 = vector.broadcast %cst_86 : f32 to vector<1x16x128xf32>
    %149 = arith.minimumf %147, %148 : vector<1x16x128xf32>
    %150 = math.exp %149 : vector<1x16x128xf32>
    %cst_87 = arith.constant 2.000000e+00 : f32
    %151 = vector.broadcast %cst_87 : f32 to vector<1x16x128xf32>
    %152 = arith.addf %150, %151 : vector<1x16x128xf32>
    %153 = arith.mulf %150, %152 : vector<1x16x128xf32>
    %154 = arith.mulf %147, %153 : vector<1x16x128xf32>
    %cst_88 = arith.constant 2.000000e+00 : f32
    %155 = vector.broadcast %cst_88 : f32 to vector<1x16x128xf32>
    %156 = arith.addf %153, %155 : vector<1x16x128xf32>
    %157 = tpu.reciprocal %156 {approx = true} : vector<1x16x128xf32> -> vector<1x16x128xf32>
    %158 = arith.mulf %154, %157 : vector<1x16x128xf32>
    %c0_89 = arith.constant 0 : index
    %c2_90 = arith.constant 2 : index
    %c0_91 = arith.constant 0 : index
    %159 = vector.load %arg1[%c0_89, %c2_90, %c0_91] : memref<1x20x128xf32, #tpu.memory_space<vmem>>, vector<1x16x128xf32>
    %160 = arith.truncf %159 : vector<1x16x128xf32> to vector<1x16x128xbf16>
    %161 = vector.shape_cast %160 : vector<1x16x128xbf16> to vector<16x128xbf16>
    %c0_92 = arith.constant 0 : index
    %c0_93 = arith.constant 0 : index
    %162 = vector.load %arg11[%c0_92, %c0_93] : memref<128x128xbf16, #tpu.memory_space<vmem>>, vector<128x128xbf16>
    %cst_94 = arith.constant dense<0.000000e+00> : vector<16x128xf32>
    %163 = tpu.matmul %161, %162, %cst_94 {dimension_numbers = #tpu.dot_dimension_numbers<[1], [0], [0], [1], [0, 0, 1, 1], [], []>} : vector<16x128xbf16>, vector<128x128xbf16>, vector<16x128xf32> -> vector<16x128xf32>
    %164 = vector.shape_cast %163 : vector<16x128xf32> to vector<1x16x128xf32>
    %165 = arith.addf %158, %164 : vector<1x16x128xf32>
    %c0_95 = arith.constant 0 : index
    %c0_96 = arith.constant 0 : index
    %166 = vector.load %arg12[%c0_95, %c0_96] : memref<1x128xf32, #tpu.memory_space<vmem>>, vector<1x128xf32>
    %167 = vector.shape_cast %166 : vector<1x128xf32> to vector<1x1x128xf32>
    %168 = vector.broadcast %167 : vector<1x1x128xf32> to vector<1x16x128xf32>
    %169 = arith.addf %165, %168 : vector<1x16x128xf32>
    %c0_97 = arith.constant 0 : index
    %c0_98 = arith.constant 0 : index
    %c0_99 = arith.constant 0 : index
    %170 = vector.load %arg14[%c0_97, %c0_98, %c0_99] : memref<1x16x128xf32, #tpu.memory_space<vmem>>, vector<1x16x128xf32>
    tpu.vector_store %arg14[%c0_97, %c0_98, %c0_99], %169 {strides = array<i32>} : memref<1x16x128xf32, #tpu.memory_space<vmem>>, vector<1x16x128xf32>,
    return
  }
  func.func @transform_0(%arg0: i32) -> (i32, i32, i32) {
    %c0_i32 = arith.constant 0 : i32
    %c0_i32_0 = arith.constant 0 : i32
    %c0_i32_1 = arith.constant 0 : i32
    return %arg0, %c0_i32, %c0_i32_0 : i32, i32, i32
  }
  func.func @transform_1(%arg0: i32) -> (i32, i32, i32) {
    %c0_i32 = arith.constant 0 : i32
    %c0_i32_0 = arith.constant 0 : i32
    %c0_i32_1 = arith.constant 0 : i32
    return %arg0, %c0_i32, %c0_i32_0 : i32, i32, i32
  }
  func.func @transform_2(%arg0: i32) -> (i32, i32, i32) {
    %c0_i32 = arith.constant 0 : i32
    %c0_i32_0 = arith.constant 0 : i32
    %c0_i32_1 = arith.constant 0 : i32
    %c0_i32_2 = arith.constant 0 : i32
    return %c0_i32, %c0_i32_0, %c0_i32_1 : i32, i32, i32
  }
  func.func @transform_3(%arg0: i32) -> (i32, i32) {
    %c0_i32 = arith.constant 0 : i32
    %c0_i32_0 = arith.constant 0 : i32
    %c0_i32_1 = arith.constant 0 : i32
    return %c0_i32, %c0_i32_0 : i32, i32
  }
  func.func @transform_4(%arg0: i32) -> (i32, i32) {
    %c0_i32 = arith.constant 0 : i32
    %c0_i32_0 = arith.constant 0 : i32
    %c0_i32_1 = arith.constant 0 : i32
    return %c0_i32, %c0_i32_0 : i32, i32
  }
  func.func @transform_5(%arg0: i32) -> (i32, i32) {
    %c0_i32 = arith.constant 0 : i32
    %c0_i32_0 = arith.constant 0 : i32
    %c0_i32_1 = arith.constant 0 : i32
    return %c0_i32, %c0_i32_0 : i32, i32
  }
  func.func @transform_6(%arg0: i32) -> (i32, i32, i32) {
    %c0_i32 = arith.constant 0 : i32
    %c0_i32_0 = arith.constant 0 : i32
    %c0_i32_1 = arith.constant 0 : i32
    %c0_i32_2 = arith.constant 0 : i32
    return %c0_i32, %c0_i32_0, %c0_i32_1 : i32, i32, i32
  }
  func.func @transform_7(%arg0: i32) -> (i32, i32) {
    %c0_i32 = arith.constant 0 : i32
    %c0_i32_0 = arith.constant 0 : i32
    %c0_i32_1 = arith.constant 0 : i32
    return %c0_i32, %c0_i32_0 : i32, i32
  }
  func.func @transform_8(%arg0: i32) -> (i32, i32) {
    %c0_i32 = arith.constant 0 : i32
    %c0_i32_0 = arith.constant 0 : i32
    %c0_i32_1 = arith.constant 0 : i32
    return %c0_i32, %c0_i32_0 : i32, i32
  }
  func.func @transform_9(%arg0: i32) -> (i32, i32) {
    %c0_i32 = arith.constant 0 : i32
    %c0_i32_0 = arith.constant 0 : i32
    %c0_i32_1 = arith.constant 0 : i32
    return %c0_i32, %c0_i32_0 : i32, i32
  }
  func.func @transform_10(%arg0: i32) -> (i32, i32) {
    %c0_i32 = arith.constant 0 : i32
    %c0_i32_0 = arith.constant 0 : i32
    %c0_i32_1 = arith.constant 0 : i32
    return %c0_i32, %c0_i32_0 : i32, i32
  }
  func.func @transform_11(%arg0: i32) -> (i32, i32) {
    %c0_i32 = arith.constant 0 : i32
    %c0_i32_0 = arith.constant 0 : i32
    %c0_i32_1 = arith.constant 0 : i32
    return %c0_i32, %c0_i32_0 : i32, i32
  }
  func.func @transform_12(%arg0: i32) -> (i32, i32) {
    %c0_i32 = arith.constant 0 : i32
    %c0_i32_0 = arith.constant 0 : i32
    %c0_i32_1 = arith.constant 0 : i32
    return %c0_i32, %c0_i32_0 : i32, i32
  }
  func.func @transform_13(%arg0: i32) -> (i32, i32, i32) {
    %c0_i32 = arith.constant 0 : i32
    %c0_i32_0 = arith.constant 0 : i32
    %c0_i32_1 = arith.constant 0 : i32
    return %arg0, %c0_i32, %c0_i32_0 : i32, i32, i32
  }
}

</mosaic_0001>

<llo_original>
// kernel: tpu_custom_call.1
$region0: #{tpu_custom_call.1}
  #allocation0 [shape = 'u32[]', space=smem, size = 0x4, offset = 0x4, fixed_abs, tag = 'smem constant byte address 0x4 - core index']
  #allocation1 [shape = 'u32[144,128]{1,0:T(1,128)}', space=vmem, size = 0x12000, scoped, tag = 'internal scratch']
  %s0 = inlined_call_operand.vmem [shape: f32[2,20,128], index: 0, kind: input, shape index: {}]
  %s1 = inlined_call_operand.hbm [shape: f32[2,1,128], index: 1, kind: input, shape index: {}]
  %s2 = inlined_call_operand.hbm [shape: bf16[5,128,128], index: 2, kind: input, shape index: {}]
  %s3 = inlined_call_operand.vmem [shape: f32[1,128], index: 3, kind: input, shape index: {}]
  %s4 = inlined_call_operand.hbm [shape: f32[1,128], index: 4, kind: input, shape index: {}]
  %s5 = inlined_call_operand.hbm [shape: f32[1,128], index: 5, kind: input, shape index: {}]
  %s6 = inlined_call_operand.hbm [shape: bf16[5,128,128], index: 6, kind: input, shape index: {}]
  %s7 = inlined_call_operand.hbm [shape: f32[1,128], index: 7, kind: input, shape index: {}]
  %s8 = inlined_call_operand.hbm [shape: f32[1,128], index: 8, kind: input, shape index: {}]
  %s9 = inlined_call_operand.hbm [shape: f32[1,128], index: 9, kind: input, shape index: {}]
  %s10 = inlined_call_operand.vmem [shape: bf16[128,128], index: 10, kind: input, shape index: {}]
  %s11 = inlined_call_operand.hbm [shape: f32[1,128], index: 11, kind: input, shape index: {}]
  %s12 = inlined_call_operand.vmem [shape: bf16[128,128], index: 12, kind: input, shape index: {}]
  %s13 = inlined_call_operand.hbm [shape: f32[2,16,128], index: 13, kind: output, shape index: {}]
  %s14 = sld [smem:[#allocation0]]
  $region121: #{tpu_custom_call.1} parent=0
    _
  %s16 = ssub.s32 1, %s14
  %s17 = scalar_select 0, %s16, %s14
  $region1: #{tpu_custom_call.1} parent=0
    #allocation2 [shape = 'u8[1024]{0}', space=vmem, size = 0x400, scoped, tag = 'input window, operand 1']
    #allocation3 [shape = 's32[2]{0}', space=sflag, size = 0x8, scoped, tag = 'scoped memory for tpu_custom_call.1']
    #allocation4 [shape = 's32[2]{0}', space=sflag, size = 0x8, scoped, tag = 'scoped memory for tpu_custom_call.1']
    #allocation5 [shape = 'u8[163840]{0}', space=vmem, size = 0x28000, scoped, tag = 'input window, operand 2, single buffered']
    #allocation6 [shape = 's32[1]{0}', space=sflag, size = 0x4, scoped, tag = 'scoped memory for tpu_custom_call.1']
    #allocation7 [shape = 'u8[512]{0}', space=vmem, size = 0x400, scoped, tag = 'input window, operand 4, single buffered']
    #allocation8 [shape = 'u8[512]{0}', space=vmem, size = 0x400, scoped, tag = 'input window, operand 5, single buffered']
    #allocation9 [shape = 's32[1]{0}', space=sflag, size = 0x4, scoped, tag = 'scoped memory for tpu_custom_call.1']
    #allocation10 [shape = 'u8[163840]{0}', space=vmem, size = 0x28000, scoped, tag = 'input window, operand 6, single buffered']
    #allocation11 [shape = 'u8[512]{0}', space=vmem, size = 0x400, scoped, tag = 'input window, operand 7, single buffered']
    #allocation12 [shape = 's32[1]{0}', space=sflag, size = 0x4, scoped, tag = 'scoped memory for tpu_custom_call.1']
    #allocation13 [shape = 'u8[512]{0}', space=vmem, size = 0x400, scoped, tag = 'input window, operand 8, single buffered']
    #allocation14 [shape = 'u8[512]{0}', space=vmem, size = 0x400, scoped, tag = 'input window, operand 9, single buffered']
    #allocation15 [shape = 's32[1]{0}', space=sflag, size = 0x4, scoped, tag = 'scoped memory for tpu_custom_call.1']
    #allocation16 [shape = 'u8[512]{0}', space=vmem, size = 0x400, scoped, tag = 'input window, operand 11, single buffered']
    #allocation17 [shape = 'u8[16384]{0}', space=vmem, size = 0x4000, scoped, tag = 'output window, operand 0']
    %18 = vsyncpa [#allocation3], 0
    %s19 = scalar_lea.sflag [#allocation3], 1
    %20 = vsyncpa %s19, 0
    %21 = vsyncpa [#allocation6], 0
    %22 = vsyncpa [#allocation9], 0
    %23 = vsyncpa [#allocation12], 0
    %24 = vsyncpa [#allocation15], 0
    %25 = vsyncpa [#allocation4], 0
    %s26 = scalar_lea.sflag [#allocation4], 1
    %27 = vsyncpa %s26, 0
    loop: start=0, step=1, limit=4
    $region2: #{tpu_custom_call.1} parent=1 // loop_pre_header
      _
    $region3: #{tpu_custom_call.1} parent=1 // loop_header
      %s29 = sphi 0, %s33
      %p30 = scmp.ge.s32.totalorder %s29, 4
      %s39 = sphi 0, %s41
      %s42 = sphi 0, %s39
      %s43 = sphi 0, %s42
      %s59 = sphi 0, %s43
      %s65 = sphi 0, %s67
      %s68 = sphi 0, %s65
      %s69 = sphi 0, %s68
      %s85 = sphi 0, %s69
      %s89 = sphi 0, %s89
      %s91 = sphi 0, %s89
      %s92 = sphi 0, %s91
      %s106 = sphi 0, %s92
      %s110 = sphi 0, %s110
      %s112 = sphi 0, %s110
      %s113 = sphi 0, %s112
      %s127 = sphi 0, %s113
      %s131 = sphi 0, %s131
      %s133 = sphi 0, %s131
      %s134 = sphi 0, %s133
      %s148 = sphi 0, %s134
      %s152 = sphi 0, %s152
      %s154 = sphi 0, %s152
      %s155 = sphi 0, %s154
      %s169 = sphi 0, %s155
      %s173 = sphi 0, %s173
      %s175 = sphi 0, %s173
      %s176 = sphi 0, %s175
      %s190 = sphi 0, %s176
      %s194 = sphi 0, %s194
      %s196 = sphi 0, %s194
      %s197 = sphi 0, %s196
      %s211 = sphi 0, %s197
      %s215 = sphi 0, %s215
      %s217 = sphi 0, %s215
      %s218 = sphi 0, %s217
      %s232 = sphi 0, %s218
      %s236 = sphi 0, %s236
      %s238 = sphi 0, %s236
      %s239 = sphi 0, %s238
      %s253 = sphi 0, %s239
      %s257 = sphi 0, %s257
      %s259 = sphi 0, %s257
      %s260 = sphi 0, %s259
      %s274 = sphi 0, %s260
      %s278 = sphi 0, %s278
      %s280 = sphi 0, %s278
      %s281 = sphi 0, %s280
      %s295 = sphi 0, %s281
      %s299 = sphi 0, %s299
      %s301 = sphi 0, %s299
      %s302 = sphi 0, %s301
      %s316 = sphi 0, %s302
      %s322 = sphi 0, %s324
      %s325 = sphi 0, %s322
      %s326 = sphi 0, %s325
      %s342 = sphi 0, %s326
    $region4: #{tpu_custom_call.1} parent=1 // loop_header_branch
      %32 = sbr.rel (%p30) target = $region8
    $region5: #{tpu_custom_call.1} parent=1 // loop_body
      %s34 = ssub.s32 %s29, 1
      %s35 = ssub.s32 %s29, 2
      %s36 = sadd.s32 %s29, 1
      %s37 = ssub.s32 %s29, %s36
      %p38 = scmp.eq.s32.totalorder %s37, 0
      %s40 = sadd.s32 %s39, 1
      %s41 = scalar_select %p38, %s39, %s40
      %p44 = pneg %p38
      %p45 = scmp.eq.s32.totalorder %s29, 1
      %p46 = por %p44, %p45
      %p47 = scmp.ne.s32.totalorder %s39, %s42
      %p48 = scmp.eq.s32.totalorder %s29, 0
      %p49 = por %p47, %p48
      %p50 = scmp.ne.s32.totalorder %s39, %s42
      %p51 = scmp.eq.s32.totalorder %s34, 1
      %p52 = por %p50, %p51
      %p53 = scmp.ne.s32.totalorder %s42, %s43
      %p54 = scmp.eq.s32.totalorder %s34, 0
      %p55 = por %p53, %p54
      %p56 = scmp.ne.s32.totalorder %s42, %s43
      %p57 = scmp.eq.s32.totalorder %s35, 1
      %p58 = por %p56, %p57
      %p60 = scmp.ne.s32.totalorder %s43, %s59
      %p61 = scmp.eq.s32.totalorder %s35, 0
      %p62 = por %p60, %p61
      %s63 = ssub.s32 %s29, %s36
      %p64 = scmp.eq.s32.totalorder %s63, 0
      %s66 = sadd.s32 %s65, 1
      %s67 = scalar_select %p64, %s65, %s66
      %p70 = pneg %p64
      %p71 = scmp.eq.s32.totalorder %s29, 1
      %p72 = por %p70, %p71
      %p73 = scmp.ne.s32.totalorder %s65, %s68
      %p74 = scmp.eq.s32.totalorder %s29, 0
      %p75 = por %p73, %p74
      %p76 = scmp.ne.s32.totalorder %s65, %s68
      %p77 = scmp.eq.s32.totalorder %s34, 1
      %p78 = por %p76, %p77
      %p79 = scmp.ne.s32.totalorder %s68, %s69
      %p80 = scmp.eq.s32.totalorder %s34, 0
      %p81 = por %p79, %p80
      %p82 = scmp.ne.s32.totalorder %s68, %s69
      %p83 = scmp.eq.s32.totalorder %s35, 1
      %p84 = por %p82, %p83
      %p86 = scmp.ne.s32.totalorder %s69, %s85
      %p87 = scmp.eq.s32.totalorder %s35, 0
      %p88 = por %p86, %p87
      %s90 = sadd.s32 %s89, 1
      %p93 = scmp.eq.s32.totalorder %s29, 1
      %p94 = scmp.ne.s32.totalorder %s89, %s91
      %p95 = scmp.eq.s32.totalorder %s29, 0
      %p96 = por %p94, %p95
      %p97 = scmp.ne.s32.totalorder %s89, %s91
      %p98 = scmp.eq.s32.totalorder %s34, 1
      %p99 = por %p97, %p98
      %p100 = scmp.ne.s32.totalorder %s91, %s92
      %p101 = scmp.eq.s32.totalorder %s34, 0
      %p102 = por %p100, %p101
      %p103 = scmp.ne.s32.totalorder %s91, %s92
      %p104 = scmp.eq.s32.totalorder %s35, 1
      %p105 = por %p103, %p104
      %p107 = scmp.ne.s32.totalorder %s92, %s106
      %p108 = scmp.eq.s32.totalorder %s35, 0
      %p109 = por %p107, %p108
      %s111 = sadd.s32 %s110, 1
      %p114 = scmp.eq.s32.totalorder %s29, 1
      %p115 = scmp.ne.s32.totalorder %s110, %s112
      %p116 = scmp.eq.s32.totalorder %s29, 0
      %p117 = por %p115, %p116
      %p118 = scmp.ne.s32.totalorder %s110, %s112
      %p119 = scmp.eq.s32.totalorder %s34, 1
      %p120 = por %p118, %p119
      %p121 = scmp.ne.s32.totalorder %s112, %s113
      %p122 = scmp.eq.s32.totalorder %s34, 0
      %p123 = por %p121, %p122
      %p124 = scmp.ne.s32.totalorder %s112, %s113
      %p125 = scmp.eq.s32.totalorder %s35, 1
      %p126 = por %p124, %p125
      %p128 = scmp.ne.s32.totalorder %s113, %s127
      %p129 = scmp.eq.s32.totalorder %s35, 0
      %p130 = por %p128, %p129
      %s132 = sadd.s32 %s131, 1
      %p135 = scmp.eq.s32.totalorder %s29, 1
      %p136 = scmp.ne.s32.totalorder %s131, %s133
      %p137 = scmp.eq.s32.totalorder %s29, 0
      %p138 = por %p136, %p137
      %p139 = scmp.ne.s32.totalorder %s131, %s133
      %p140 = scmp.eq.s32.totalorder %s34, 1
      %p141 = por %p139, %p140
      %p142 = scmp.ne.s32.totalorder %s133, %s134
      %p143 = scmp.eq.s32.totalorder %s34, 0
      %p144 = por %p142, %p143
      %p145 = scmp.ne.s32.totalorder %s133, %s134
      %p146 = scmp.eq.s32.totalorder %s35, 1
      %p147 = por %p145, %p146
      %p149 = scmp.ne.s32.totalorder %s134, %s148
      %p150 = scmp.eq.s32.totalorder %s35, 0
      %p151 = por %p149, %p150
      %s153 = sadd.s32 %s152, 1
      %p156 = scmp.eq.s32.totalorder %s29, 1
      %p157 = scmp.ne.s32.totalorder %s152, %s154
      %p158 = scmp.eq.s32.totalorder %s29, 0
      %p159 = por %p157, %p158
      %p160 = scmp.ne.s32.totalorder %s152, %s154
      %p161 = scmp.eq.s32.totalorder %s34, 1
      %p162 = por %p160, %p161
      %p163 = scmp.ne.s32.totalorder %s154, %s155
      %p164 = scmp.eq.s32.totalorder %s34, 0
      %p165 = por %p163, %p164
      %p166 = scmp.ne.s32.totalorder %s154, %s155
      %p167 = scmp.eq.s32.totalorder %s35, 1
      %p168 = por %p166, %p167
      %p170 = scmp.ne.s32.totalorder %s155, %s169
      %p171 = scmp.eq.s32.totalorder %s35, 0
      %p172 = por %p170, %p171
      %s174 = sadd.s32 %s173, 1
      %p177 = scmp.eq.s32.totalorder %s29, 1
      %p178 = scmp.ne.s32.totalorder %s173, %s175
      %p179 = scmp.eq.s32.totalorder %s29, 0
      %p180 = por %p178, %p179
      %p181 = scmp.ne.s32.totalorder %s173, %s175
      %p182 = scmp.eq.s32.totalorder %s34, 1
      %p183 = por %p181, %p182
      %p184 = scmp.ne.s32.totalorder %s175, %s176
      %p185 = scmp.eq.s32.totalorder %s34, 0
      %p186 = por %p184, %p185
      %p187 = scmp.ne.s32.totalorder %s175, %s176
      %p188 = scmp.eq.s32.totalorder %s35, 1
      %p189 = por %p187, %p188
      %p191 = scmp.ne.s32.totalorder %s176, %s190
      %p192 = scmp.eq.s32.totalorder %s35, 0
      %p193 = por %p191, %p192
      %s195 = sadd.s32 %s194, 1
      %p198 = scmp.eq.s32.totalorder %s29, 1
      %p199 = scmp.ne.s32.totalorder %s194, %s196
      %p200 = scmp.eq.s32.totalorder %s29, 0
      %p201 = por %p199, %p200
      %p202 = scmp.ne.s32.totalorder %s194, %s196
      %p203 = scmp.eq.s32.totalorder %s34, 1
      %p204 = por %p202, %p203
      %p205 = scmp.ne.s32.totalorder %s196, %s197
      %p206 = scmp.eq.s32.totalorder %s34, 0
      %p207 = por %p205, %p206
      %p208 = scmp.ne.s32.totalorder %s196, %s197
      %p209 = scmp.eq.s32.totalorder %s35, 1
      %p210 = por %p208, %p209
      %p212 = scmp.ne.s32.totalorder %s197, %s211
      %p213 = scmp.eq.s32.totalorder %s35, 0
      %p214 = por %p212, %p213
      %s216 = sadd.s32 %s215, 1
      %p219 = scmp.eq.s32.totalorder %s29, 1
      %p220 = scmp.ne.s32.totalorder %s215, %s217
      %p221 = scmp.eq.s32.totalorder %s29, 0
      %p222 = por %p220, %p221
      %p223 = scmp.ne.s32.totalorder %s215, %s217
      %p224 = scmp.eq.s32.totalorder %s34, 1
      %p225 = por %p223, %p224
      %p226 = scmp.ne.s32.totalorder %s217, %s218
      %p227 = scmp.eq.s32.totalorder %s34, 0
      %p228 = por %p226, %p227
      %p229 = scmp.ne.s32.totalorder %s217, %s218
      %p230 = scmp.eq.s32.totalorder %s35, 1
      %p231 = por %p229, %p230
      %p233 = scmp.ne.s32.totalorder %s218, %s232
      %p234 = scmp.eq.s32.totalorder %s35, 0
      %p235 = por %p233, %p234
      %s237 = sadd.s32 %s236, 1
      %p240 = scmp.eq.s32.totalorder %s29, 1
      %p241 = scmp.ne.s32.totalorder %s236, %s238
      %p242 = scmp.eq.s32.totalorder %s29, 0
      %p243 = por %p241, %p242
      %p244 = scmp.ne.s32.totalorder %s236, %s238
      %p245 = scmp.eq.s32.totalorder %s34, 1
      %p246 = por %p244, %p245
      %p247 = scmp.ne.s32.totalorder %s238, %s239
      %p248 = scmp.eq.s32.totalorder %s34, 0
      %p249 = por %p247, %p248
      %p250 = scmp.ne.s32.totalorder %s238, %s239
      %p251 = scmp.eq.s32.totalorder %s35, 1
      %p252 = por %p250, %p251
      %p254 = scmp.ne.s32.totalorder %s239, %s253
      %p255 = scmp.eq.s32.totalorder %s35, 0
      %p256 = por %p254, %p255
      %s258 = sadd.s32 %s257, 1
      %p261 = scmp.eq.s32.totalorder %s29, 1
      %p262 = scmp.ne.s32.totalorder %s257, %s259
      %p263 = scmp.eq.s32.totalorder %s29, 0
      %p264 = por %p262, %p263
      %p265 = scmp.ne.s32.totalorder %s257, %s259
      %p266 = scmp.eq.s32.totalorder %s34, 1
      %p267 = por %p265, %p266
      %p268 = scmp.ne.s32.totalorder %s259, %s260
      %p269 = scmp.eq.s32.totalorder %s34, 0
      %p270 = por %p268, %p269
      %p271 = scmp.ne.s32.totalorder %s259, %s260
      %p272 = scmp.eq.s32.totalorder %s35, 1
      %p273 = por %p271, %p272
      %p275 = scmp.ne.s32.totalorder %s260, %s274
      %p276 = scmp.eq.s32.totalorder %s35, 0
      %p277 = por %p275, %p276
      %s279 = sadd.s32 %s278, 1
      %p282 = scmp.eq.s32.totalorder %s29, 1
      %p283 = scmp.ne.s32.totalorder %s278, %s280
      %p284 = scmp.eq.s32.totalorder %s29, 0
      %p285 = por %p283, %p284
      %p286 = scmp.ne.s32.totalorder %s278, %s280
      %p287 = scmp.eq.s32.totalorder %s34, 1
      %p288 = por %p286, %p287
      %p289 = scmp.ne.s32.totalorder %s280, %s281
      %p290 = scmp.eq.s32.totalorder %s34, 0
      %p291 = por %p289, %p290
      %p292 = scmp.ne.s32.totalorder %s280, %s281
      %p293 = scmp.eq.s32.totalorder %s35, 1
      %p294 = por %p292, %p293
      %p296 = scmp.ne.s32.totalorder %s281, %s295
      %p297 = scmp.eq.s32.totalorder %s35, 0
      %p298 = por %p296, %p297
      %s300 = sadd.s32 %s299, 1
      %p303 = scmp.eq.s32.totalorder %s29, 1
      %p304 = scmp.ne.s32.totalorder %s299, %s301
      %p305 = scmp.eq.s32.totalorder %s29, 0
      %p306 = por %p304, %p305
      %p307 = scmp.ne.s32.totalorder %s299, %s301
      %p308 = scmp.eq.s32.totalorder %s34, 1
      %p309 = por %p307, %p308
      %p310 = scmp.ne.s32.totalorder %s301, %s302
      %p311 = scmp.eq.s32.totalorder %s34, 0
      %p312 = por %p310, %p311
      %p313 = scmp.ne.s32.totalorder %s301, %s302
      %p314 = scmp.eq.s32.totalorder %s35, 1
      %p315 = por %p313, %p314
      %p317 = scmp.ne.s32.totalorder %s302, %s316
      %p318 = scmp.eq.s32.totalorder %s35, 0
      %p319 = por %p317, %p318
      %s320 = ssub.s32 %s29, %s36
      %p321 = scmp.eq.s32.totalorder %s320, 0
      %s323 = sadd.s32 %s322, 1
      %s324 = scalar_select %p321, %s322, %s323
      %p327 = pneg %p321
      %p328 = scmp.eq.s32.totalorder %s29, 1
      %p329 = por %p327, %p328
      %p330 = scmp.ne.s32.totalorder %s322, %s325
      %p331 = scmp.eq.s32.totalorder %s29, 0
      %p332 = por %p330, %p331
      %p333 = scmp.ne.s32.totalorder %s322, %s325
      %p334 = scmp.eq.s32.totalorder %s34, 1
      %p335 = por %p333, %p334
      %p336 = scmp.ne.s32.totalorder %s325, %s326
      %p337 = scmp.eq.s32.totalorder %s34, 0
      %p338 = por %p336, %p337
      %p339 = scmp.ne.s32.totalorder %s325, %s326
      %p340 = scmp.eq.s32.totalorder %s35, 1
      %p341 = por %p339, %p340
      %p343 = scmp.ne.s32.totalorder %s326, %s342
      %p344 = scmp.eq.s32.totalorder %s35, 0
      %p345 = por %p343, %p344
      %p346 = scmp.le.s32.totalorder 1, %s29
      %p347 = scmp.lt.s32.totalorder %s29, 3
      %p348 = pnand %p346, %p347
      %p349 = pneg %p348
      // Predicated region
      $region9: #{tpu_custom_call.1} parent=5 // pred_check
        _
      $region10: #{tpu_custom_call.1} parent=5 // pred_check_branch
        %351 = sbr.rel (%p348) target = $region12
      $region11: #{tpu_custom_call.1} parent=5 // pred_region
        %s352 = ssub.s32 %s29, 1
        // Predicated region
        $region13: #{tpu_custom_call.1} parent=11 // pred_check
          %p353 = pneg %p102
        $region14: #{tpu_custom_call.1} parent=11 // pred_check_branch
          %355 = sbr.rel (%p353) target = $region16
        $region15: #{tpu_custom_call.1} parent=11 // pred_region
          %s357 = ssub.s32 5120, 5120
          %358 = vsyncadd [#allocation6], %s357
          %s359 = sshll.u32 [#allocation5], 4
          %s360 = int_to_ptr.vmem [resolvable:$true] %s359
          %365 = dma.hbm_to_vmem [thread:$0]  %s2, 5120, %s360, [#allocation6], 64, 64, 4
        $region16: #{tpu_custom_call.1} parent=11 // pred_fallthru
          _
        // Predicated region
        $region17: #{tpu_custom_call.1} parent=11 // pred_check
          %p366 = pneg %p123
        $region18: #{tpu_custom_call.1} parent=11 // pred_check_branch
          %368 = sbr.rel (%p366) target = $region20
        $region19: #{tpu_custom_call.1} parent=11 // pred_region
          _
        $region20: #{tpu_custom_call.1} parent=11 // pred_fallthru
          _
        // Predicated region
        $region21: #{tpu_custom_call.1} parent=11 // pred_check
          %p369 = pneg %p144
        $region22: #{tpu_custom_call.1} parent=11 // pred_check_branch
          %371 = sbr.rel (%p369) target = $region24
        $region23: #{tpu_custom_call.1} parent=11 // pred_region
          %s373 = ssub.s32 16, 16
          %374 = vsyncadd [#allocation6], %s373
          %s376 = sshll.u32 [#allocation7], 4
          %s377 = int_to_ptr.vmem [resolvable:$true] %s376
          %379 = dma.hbm_to_vmem [thread:$0]  %s4, 16, %s377, [#allocation6]
        $region24: #{tpu_custom_call.1} parent=11 // pred_fallthru
          _
        // Predicated region
        $region25: #{tpu_custom_call.1} parent=11 // pred_check
          %p380 = pneg %p165
        $region26: #{tpu_custom_call.1} parent=11 // pred_check_branch
          %382 = sbr.rel (%p380) target = $region28
        $region27: #{tpu_custom_call.1} parent=11 // pred_region
          %s384 = ssub.s32 16, 16
          %385 = vsyncadd [#allocation9], %s384
          %s387 = sshll.u32 [#allocation8], 4
          %s388 = int_to_ptr.vmem [resolvable:$true] %s387
          %390 = dma.hbm_to_vmem [thread:$0]  %s5, 16, %s388, [#allocation9]
        $region28: #{tpu_custom_call.1} parent=11 // pred_fallthru
          _
        // Predicated region
        $region29: #{tpu_custom_call.1} parent=11 // pred_check
          %p391 = pneg %p186
        $region30: #{tpu_custom_call.1} parent=11 // pred_check_branch
          %393 = sbr.rel (%p391) target = $region32
        $region31: #{tpu_custom_call.1} parent=11 // pred_region
          %s395 = ssub.s32 5120, 5120
          %396 = vsyncadd [#allocation9], %s395
          %s397 = sshll.u32 [#allocation10], 4
          %s398 = int_to_ptr.vmem [resolvable:$true] %s397
          %403 = dma.hbm_to_vmem [thread:$0]  %s6, 5120, %s398, [#allocation9], 64, 64, 4
        $region32: #{tpu_custom_call.1} parent=11 // pred_fallthru
          _
        // Predicated region
        $region33: #{tpu_custom_call.1} parent=11 // pred_check
          %p404 = pneg %p207
        $region34: #{tpu_custom_call.1} parent=11 // pred_check_branch
          %406 = sbr.rel (%p404) target = $region36
        $region35: #{tpu_custom_call.1} parent=11 // pred_region
          %s408 = ssub.s32 16, 16
          %409 = vsyncadd [#allocation12], %s408
          %s411 = sshll.u32 [#allocation11], 4
          %s412 = int_to_ptr.vmem [resolvable:$true] %s411
          %414 = dma.hbm_to_vmem [thread:$0]  %s7, 16, %s412, [#allocation12]
        $region36: #{tpu_custom_call.1} parent=11 // pred_fallthru
          _
        // Predicated region
        $region37: #{tpu_custom_call.1} parent=11 // pred_check
          %p415 = pneg %p228
        $region38: #{tpu_custom_call.1} parent=11 // pred_check_branch
          %417 = sbr.rel (%p415) target = $region40
        $region39: #{tpu_custom_call.1} parent=11 // pred_region
          %s419 = ssub.s32 16, 16
          %420 = vsyncadd [#allocation12], %s419
          %s422 = sshll.u32 [#allocation13], 4
          %s423 = int_to_ptr.vmem [resolvable:$true] %s422
          %425 = dma.hbm_to_vmem [thread:$0]  %s8, 16, %s423, [#allocation12]
        $region40: #{tpu_custom_call.1} parent=11 // pred_fallthru
          _
        // Predicated region
        $region41: #{tpu_custom_call.1} parent=11 // pred_check
          %p426 = pneg %p249
        $region42: #{tpu_custom_call.1} parent=11 // pred_check_branch
          %428 = sbr.rel (%p426) target = $region44
        $region43: #{tpu_custom_call.1} parent=11 // pred_region
          %s430 = ssub.s32 16, 16
          %431 = vsyncadd [#allocation15], %s430
          %s433 = sshll.u32 [#allocation14], 4
          %s434 = int_to_ptr.vmem [resolvable:$true] %s433
          %436 = dma.hbm_to_vmem [thread:$0]  %s9, 16, %s434, [#allocation15]
        $region44: #{tpu_custom_call.1} parent=11 // pred_fallthru
          _
        // Predicated region
        $region45: #{tpu_custom_call.1} parent=11 // pred_check
          %p437 = pneg %p270
        $region46: #{tpu_custom_call.1} parent=11 // pred_check_branch
          %439 = sbr.rel (%p437) target = $region48
        $region47: #{tpu_custom_call.1} parent=11 // pred_region
          _
        $region48: #{tpu_custom_call.1} parent=11 // pred_fallthru
          _
        // Predicated region
        $region49: #{tpu_custom_call.1} parent=11 // pred_check
          %p440 = pneg %p291
        $region50: #{tpu_custom_call.1} parent=11 // pred_check_branch
          %442 = sbr.rel (%p440) target = $region52
        $region51: #{tpu_custom_call.1} parent=11 // pred_region
          %s444 = ssub.s32 16, 16
          %445 = vsyncadd [#allocation15], %s444
          %s447 = sshll.u32 [#allocation16], 4
          %s448 = int_to_ptr.vmem [resolvable:$true] %s447
          %450 = dma.hbm_to_vmem [thread:$0]  %s11, 16, %s448, [#allocation15]
        $region52: #{tpu_custom_call.1} parent=11 // pred_fallthru
          _
        // Predicated region
        $region53: #{tpu_custom_call.1} parent=11 // pred_check
          %p451 = pneg %p312
        $region54: #{tpu_custom_call.1} parent=11 // pred_check_branch
          %453 = sbr.rel (%p451) target = $region56
        $region55: #{tpu_custom_call.1} parent=11 // pred_region
          _
        $region56: #{tpu_custom_call.1} parent=11 // pred_fallthru
          _
      $region12: #{tpu_custom_call.1} parent=5 // pred_fallthru
        _
      %p454 = scmp.lt.s32.totalorder %s29, 2
      // Predicated region
      $region57: #{tpu_custom_call.1} parent=5 // pred_check
        %p455 = pneg %p454
      $region58: #{tpu_custom_call.1} parent=5 // pred_check_branch
        %457 = sbr.rel (%p455) target = $region60
      $region59: #{tpu_custom_call.1} parent=5 // pred_region
        // Predicated region
        $region61: #{tpu_custom_call.1} parent=59 // pred_check
          %p458 = pneg %p49
        $region62: #{tpu_custom_call.1} parent=59 // pred_check_branch
          %460 = sbr.rel (%p458) target = $region64
        $region63: #{tpu_custom_call.1} parent=59 // pred_region
          %p461 = scmp.lt.s32.totalorder %s29, 1
          %s462 = scalar_select %p461, %s29, 1
          %s463 = smul.addr %s462, 3
          %s464 = smul.addr %s463, 8
          %s465 = scalar_lea.vmem %s0, %s464
        $region64: #{tpu_custom_call.1} parent=59 // pred_fallthru
          _
        // Predicated region
        $region65: #{tpu_custom_call.1} parent=59 // pred_check
          %p466 = pneg %p75
        $region66: #{tpu_custom_call.1} parent=59 // pred_check_branch
          %468 = sbr.rel (%p466) target = $region68
        $region67: #{tpu_custom_call.1} parent=59 // pred_region
          %s469 = sand.u32 %s65, 1
          %s470 = scalar_lea.sflag [#allocation3], %s469
          %s471 = sand.u32 %s65, 1
          %s472 = scalar_lea.vmem [#allocation2], %s471
          %s474 = ssub.s32 16, 16
          %475 = vsyncadd %s470, %s474
          %s476 = smul.addr %s29, 16
          %s477 = scalar_lea.hbm %s1, %s476
          %s479 = sshll.u32 %s472, 4
          %s480 = int_to_ptr.vmem [resolvable:$true] %s479
          %482 = dma.hbm_to_vmem [thread:$0]  %s477, 16, %s480, %s470
        $region68: #{tpu_custom_call.1} parent=59 // pred_fallthru
          _
      $region60: #{tpu_custom_call.1} parent=5 // pred_fallthru
        _
      %p483 = scmp.le.s32.totalorder 1, %s29
      %p484 = scmp.lt.s32.totalorder %s29, 3
      %p485 = pnand %p483, %p484
      %p486 = pneg %p485
      // Predicated region
      $region69: #{tpu_custom_call.1} parent=5 // pred_check
        _
      $region70: #{tpu_custom_call.1} parent=5 // pred_check_branch
        %488 = sbr.rel (%p485) target = $region72
      $region71: #{tpu_custom_call.1} parent=5 // pred_region
        %s489 = ssub.s32 %s29, 1
        %s490 = sand.u32 %s68, 1
        %s491 = scalar_lea.sflag [#allocation3], %s490
        %s492 = sand.u32 %s68, 1
        %s493 = scalar_lea.vmem [#allocation2], %s492
        // Predicated region
        $region73: #{tpu_custom_call.1} parent=71 // pred_check
          %p494 = pneg %p81
        $region74: #{tpu_custom_call.1} parent=71 // pred_check_branch
          %496 = sbr.rel (%p494) target = $region76
        $region75: #{tpu_custom_call.1} parent=71 // pred_region
          %497 = dma.done %s491, 16
        $region76: #{tpu_custom_call.1} parent=71 // pred_fallthru
          _
        // Predicated region
        $region77: #{tpu_custom_call.1} parent=71 // pred_check
          %p498 = pneg %p102
        $region78: #{tpu_custom_call.1} parent=71 // pred_check_branch
          %500 = sbr.rel (%p498) target = $region80
        $region79: #{tpu_custom_call.1} parent=71 // pred_region
          %501 = dma.done [#allocation6], 5120
        $region80: #{tpu_custom_call.1} parent=71 // pred_fallthru
          _
        // Predicated region
        $region81: #{tpu_custom_call.1} parent=71 // pred_check
          %p502 = pneg %p144
        $region82: #{tpu_custom_call.1} parent=71 // pred_check_branch
          %504 = sbr.rel (%p502) target = $region84
        $region83: #{tpu_custom_call.1} parent=71 // pred_region
          %505 = dma.done [#allocation6], 16
        $region84: #{tpu_custom_call.1} parent=71 // pred_fallthru
          _
        // Predicated region
        $region85: #{tpu_custom_call.1} parent=71 // pred_check
          %p506 = pneg %p165
        $region86: #{tpu_custom_call.1} parent=71 // pred_check_branch
          %508 = sbr.rel (%p506) target = $region88
        $region87: #{tpu_custom_call.1} parent=71 // pred_region
          %509 = dma.done [#allocation9], 16
        $region88: #{tpu_custom_call.1} parent=71 // pred_fallthru
          _
        // Predicated region
        $region89: #{tpu_custom_call.1} parent=71 // pred_check
          %p510 = pneg %p186
        $region90: #{tpu_custom_call.1} parent=71 // pred_check_branch
          %512 = sbr.rel (%p510) target = $region92
        $region91: #{tpu_custom_call.1} parent=71 // pred_region
          %513 = dma.done [#allocation9], 5120
        $region92: #{tpu_custom_call.1} parent=71 // pred_fallthru
          _
        // Predicated region
        $region93: #{tpu_custom_call.1} parent=71 // pred_check
          %p514 = pneg %p207
        $region94: #{tpu_custom_call.1} parent=71 // pred_check_branch
          %516 = sbr.rel (%p514) target = $region96
        $region95: #{tpu_custom_call.1} parent=71 // pred_region
          %517 = dma.done [#allocation12], 16
        $region96: #{tpu_custom_call.1} parent=71 // pred_fallthru
          _
        // Predicated region
        $region97: #{tpu_custom_call.1} parent=71 // pred_check
          %p518 = pneg %p228
        $region98: #{tpu_custom_call.1} parent=71 // pred_check_branch
          %520 = sbr.rel (%p518) target = $region100
        $region99: #{tpu_custom_call.1} parent=71 // pred_region
          %521 = dma.done [#allocation12], 16
        $region100: #{tpu_custom_call.1} parent=71 // pred_fallthru
          _
        // Predicated region
        $region101: #{tpu_custom_call.1} parent=71 // pred_check
          %p522 = pneg %p249
        $region102: #{tpu_custom_call.1} parent=71 // pred_check_branch
          %524 = sbr.rel (%p522) target = $region104
        $region103: #{tpu_custom_call.1} parent=71 // pred_region
          %525 = dma.done [#allocation15], 16
        $region104: #{tpu_custom_call.1} parent=71 // pred_fallthru
          _
        // Predicated region
        $region105: #{tpu_custom_call.1} parent=71 // pred_check
          %p526 = pneg %p291
        $region106: #{tpu_custom_call.1} parent=71 // pred_check_branch
          %528 = sbr.rel (%p526) target = $region108
        $region107: #{tpu_custom_call.1} parent=71 // pred_region
          %529 = dma.done [#allocation15], 16
        $region108: #{tpu_custom_call.1} parent=71 // pred_fallthru
          _
        %p530 = scmp.lt.s32.totalorder %s34, 1
        %s531 = scalar_select %p530, %s34, 1
        %s532 = smul.addr %s531, 3
        %s533 = smul.addr %s532, 8
        %s534 = scalar_lea.vmem %s0, %s533
        %p535 = pneg %p55
        %p536 = pneg %p52
        %s537 = sand.u32 %s68, 1
        %s538 = scalar_lea.sflag [#allocation3], %s537
        %s539 = sand.u32 %s68, 1
        %s540 = scalar_lea.vmem [#allocation2], %s539
        %p541 = pneg %p81
        %p542 = pneg %p78
        %p543 = pneg %p102
        %p544 = pneg %p99
        %p545 = pneg %p123
        %p546 = pneg %p120
        %p547 = pneg %p144
        %p548 = pneg %p141
        %p549 = pneg %p165
        %p550 = pneg %p162
        %p551 = pneg %p186
        %p552 = pneg %p183
        %p553 = pneg %p207
        %p554 = pneg %p204
        %p555 = pneg %p228
        %p556 = pneg %p225
        %p557 = pneg %p249
        %p558 = pneg %p246
        %p559 = pneg %p270
        %p560 = pneg %p267
        %p561 = pneg %p291
        %p562 = pneg %p288
        %p563 = pneg %p312
        %p564 = pneg %p309
        %p565 = pneg %p338
        %p566 = pneg %p335
        %s567 = sand.u32 %s325, 1
        %s568 = scalar_lea.sflag [#allocation4], %s567
        %s569 = sand.u32 %s325, 1
        %s570 = smul.addr %s569, 16
        %s571 = scalar_lea.vmem [#allocation17], %s570
        %p572 = scmp.lt.s32.totalorder %s34, 1
        %s573 = scalar_select %p572, %s34, 1
        %s574 = smul.addr %s573, 3
        %s575 = smul.addr %s574, 8
        %s576 = scalar_lea.vmem %s0, %s575
        %v578 = vld [vmem:[%s12] sm:$0xf]
        %v579 = vld [vmem:[%s12 + $0x4] sm:$0xf]
        %v580 = vld [vmem:[%s12 + $0x8] sm:$0xf]
        %v581 = vld [vmem:[%s12 + $0xc] sm:$0xf]
        %v582 = vld [vmem:[%s12 + $0x10] sm:$0xf]
        %v583 = vld [vmem:[%s12 + $0x14] sm:$0xf]
        %v584 = vld [vmem:[%s12 + $0x18] sm:$0xf]
        %v585 = vld [vmem:[%s12 + $0x1c] sm:$0xf]
        %v586 = vld [vmem:[%s12 + $0x20] sm:$0xf]
        %v587 = vld [vmem:[%s12 + $0x24] sm:$0xf]
        %v588 = vld [vmem:[%s12 + $0x28] sm:$0xf]
        %v589 = vld [vmem:[%s12 + $0x2c] sm:$0xf]
        %v590 = vld [vmem:[%s12 + $0x30] sm:$0xf]
        %v591 = vld [vmem:[%s12 + $0x34] sm:$0xf]
        %v592 = vld [vmem:[%s12 + $0x38] sm:$0xf]
        %v593 = vld [vmem:[%s12 + $0x3c] sm:$0xf]
        %v594 = vunpack.c.l.bf16 %v578
        %v595 = vunpack.c.l.bf16 %v579
        %v596 = vunpack.c.l.bf16 %v580
        %v597 = vunpack.c.l.bf16 %v581
        %v598 = vunpack.c.l.bf16 %v582
        %v599 = vunpack.c.l.bf16 %v583
        %v600 = vunpack.c.l.bf16 %v584
        %v601 = vunpack.c.l.bf16 %v585
        %v602 = vunpack.c.l.bf16 %v586
        %v603 = vunpack.c.l.bf16 %v587
        %v604 = vunpack.c.l.bf16 %v588
        %v605 = vunpack.c.l.bf16 %v589
        %v606 = vunpack.c.l.bf16 %v590
        %v607 = vunpack.c.l.bf16 %v591
        %v608 = vunpack.c.l.bf16 %v592
        %v609 = vunpack.c.l.bf16 %v593
        %v610 = vld [vmem:[%s3] sm:$0x1]
        %v611 = vld [vmem:[%s576] sm:$0xff]
        %v612 = vld [vmem:[%s576 + $0x8] sm:$0xff]
        %v613 = vpack.c.bf16 %v612, %v611
        %v614 = vld [vmem:[#allocation5] sm:$0xf]
        %v615 = vld [vmem:[#allocation5 + $0x4] sm:$0xf]
        %v616 = vld [vmem:[#allocation5 + $0x8] sm:$0xf]
        %v617 = vld [vmem:[#allocation5 + $0xc] sm:$0xf]
        %v618 = vld [vmem:[#allocation5 + $0x10] sm:$0xf]
        %v619 = vld [vmem:[#allocation5 + $0x14] sm:$0xf]
        %v620 = vld [vmem:[#allocation5 + $0x18] sm:$0xf]
        %v621 = vld [vmem:[#allocation5 + $0x1c] sm:$0xf]
        %v622 = vld [vmem:[#allocation5 + $0x20] sm:$0xf]
        %v623 = vld [vmem:[#allocation5 + $0x24] sm:$0xf]
        %v624 = vld [vmem:[#allocation5 + $0x28] sm:$0xf]
        %v625 = vld [vmem:[#allocation5 + $0x2c] sm:$0xf]
        %v626 = vld [vmem:[#allocation5 + $0x30] sm:$0xf]
        %v627 = vld [vmem:[#allocation5 + $0x34] sm:$0xf]
        %v628 = vld [vmem:[#allocation5 + $0x38] sm:$0xf]
        %v629 = vld [vmem:[#allocation5 + $0x3c] sm:$0xf]
        %v630 = vld [vmem:[%s576 + $0x1] sm:$0xff]
        %v631 = vld [vmem:[%s576 + $0x9] sm:$0xff]
        %v632 = vpack.c.bf16 %v631, %v630
        %s633 = scalar_lea.vmem [#allocation5], 64
        %v634 = vld [vmem:[%s633] sm:$0xf]
        %v635 = vld [vmem:[%s633 + $0x4] sm:$0xf]
        %v636 = vld [vmem:[%s633 + $0x8] sm:$0xf]
        %v637 = vld [vmem:[%s633 + $0xc] sm:$0xf]
        %v638 = vld [vmem:[%s633 + $0x10] sm:$0xf]
        %v639 = vld [vmem:[%s633 + $0x14] sm:$0xf]
        %v640 = vld [vmem:[%s633 + $0x18] sm:$0xf]
        %v641 = vld [vmem:[%s633 + $0x1c] sm:$0xf]
        %v642 = vld [vmem:[%s633 + $0x20] sm:$0xf]
        %v643 = vld [vmem:[%s633 + $0x24] sm:$0xf]
        %v644 = vld [vmem:[%s633 + $0x28] sm:$0xf]
        %v645 = vld [vmem:[%s633 + $0x2c] sm:$0xf]
        %v646 = vld [vmem:[%s633 + $0x30] sm:$0xf]
        %v647 = vld [vmem:[%s633 + $0x34] sm:$0xf]
        %v648 = vld [vmem:[%s633 + $0x38] sm:$0xf]
        %v649 = vld [vmem:[%s633 + $0x3c] sm:$0xf]
        %v666 = vunpack.c.l.b16 %v634
        %v667 = vunpack.c.l.b16 %v635
        %v668 = vunpack.c.l.b16 %v636
        %v669 = vunpack.c.l.b16 %v637
        %v670 = vunpack.c.l.b16 %v638
        %v671 = vunpack.c.l.b16 %v639
        %v672 = vunpack.c.l.b16 %v640
        %v673 = vunpack.c.l.b16 %v641
        %v674 = vunpack.c.l.b16 %v642
        %v675 = vunpack.c.l.b16 %v643
        %v676 = vunpack.c.l.b16 %v644
        %v677 = vunpack.c.l.b16 %v645
        %v678 = vunpack.c.l.b16 %v646
        %v679 = vunpack.c.l.b16 %v647
        %v680 = vunpack.c.l.b16 %v648
        %v681 = vunpack.c.l.b16 %v649
        %v682 = vpack.c.b16 %v667, %v666
        %v683 = vpack.c.b16 %v669, %v668
        %v684 = vpack.c.b16 %v671, %v670
        %v685 = vpack.c.b16 %v673, %v672
        %v686 = vpack.c.b16 %v675, %v674
        %v687 = vpack.c.b16 %v677, %v676
        %v688 = vpack.c.b16 %v679, %v678
        %v689 = vpack.c.b16 %v681, %v680
        %698 = vmatprep.subr.bf16.mxu0 0
        %699 = vmatpush1.bf16.msra.mxu0 %v682
        %700 = vmatprep.subr.bf16.mxu0 0
        %701 = vmatpush1.bf16.msra.mxu0 %v683
        %702 = vmatprep.subr.bf16.mxu0 0
        %703 = vmatpush1.bf16.msra.mxu0 %v684
        %704 = vmatprep.subr.bf16.mxu0 0
        %705 = vmatpush1.bf16.msra.mxu0 %v685
        %706 = vmatprep.subr.bf16.mxu0 0
        %707 = vmatpush1.bf16.msra.mxu0 %v686
        %708 = vmatprep.subr.bf16.mxu0 0
        %709 = vmatpush1.bf16.msra.mxu0 %v687
        %710 = vmatprep.subr.bf16.mxu0 0
        %711 = vmatpush1.bf16.msra.mxu0 %v688
        %712 = vmatprep.subr.bf16.mxu0 0
        %713 = vmatpush1.bf16.msra.mxu0 %v689
        %714 = vmatprep.subr.bf16.mxu0 0
        %715 = vmatpush1.bf16.msra.mxu0 0
        %716 = vmatprep.subr.bf16.mxu0 0
        %717 = vmatpush1.bf16.msra.mxu0 0
        %718 = vmatprep.subr.bf16.mxu0 0
        %719 = vmatpush1.bf16.msra.mxu0 0
        %720 = vmatprep.subr.bf16.mxu0 0
        %721 = vmatpush1.bf16.msra.mxu0 0
        %722 = vmatprep.subr.bf16.mxu0 0
        %723 = vmatpush1.bf16.msra.mxu0 0
        %724 = vmatprep.subr.bf16.mxu0 0
        %725 = vmatpush1.bf16.msra.mxu0 0
        %726 = vmatprep.subr.bf16.mxu0 0
        %727 = vmatpush1.bf16.msra.mxu0 0
        %728 = vmatprep.subr.bf16.mxu0 0
        %729 = vmatpush1.bf16.msra.mxu0 0
        %730 = vmatprep.mubr.bf16.mxu0 0
        %731 = vmatmul.mubr.bf16.gmra.mrb[0].mxu0 %v632
        %v732 = vpop.f32.mrb[0].mxu0
        %v733 = vadd.f32 0.0, %v732
        %v734 = vpop.f32.mrb[0].mxu0
        %v735 = vpop.f32.mrb[0].mxu0
        %v736 = vadd.f32 0.0, %v735
        %v737 = vpop.f32.mrb[0].mxu0
        %738 = vdwg.mxu0
        %v755 = vunpack.c.l.b16 %v614
        %v756 = vunpack.c.l.b16 %v615
        %v757 = vunpack.c.l.b16 %v616
        %v758 = vunpack.c.l.b16 %v617
        %v759 = vunpack.c.l.b16 %v618
        %v760 = vunpack.c.l.b16 %v619
        %v761 = vunpack.c.l.b16 %v620
        %v762 = vunpack.c.l.b16 %v621
        %v763 = vunpack.c.l.b16 %v622
        %v764 = vunpack.c.l.b16 %v623
        %v765 = vunpack.c.l.b16 %v624
        %v766 = vunpack.c.l.b16 %v625
        %v767 = vunpack.c.l.b16 %v626
        %v768 = vunpack.c.l.b16 %v627
        %v769 = vunpack.c.l.b16 %v628
        %v770 = vunpack.c.l.b16 %v629
        %v771 = vpack.c.b16 %v756, %v755
        %v772 = vpack.c.b16 %v758, %v757
        %v773 = vpack.c.b16 %v760, %v759
        %v774 = vpack.c.b16 %v762, %v761
        %v775 = vpack.c.b16 %v764, %v763
        %v776 = vpack.c.b16 %v766, %v765
        %v777 = vpack.c.b16 %v768, %v767
        %v778 = vpack.c.b16 %v770, %v769
        %787 = vmatprep.subr.bf16.mxu0 0
        %788 = vmatpush1.bf16.msra.mxu0 %v771
        %789 = vmatprep.subr.bf16.mxu0 0
        %790 = vmatpush1.bf16.msra.mxu0 %v772
        %791 = vmatprep.subr.bf16.mxu0 0
        %792 = vmatpush1.bf16.msra.mxu0 %v773
        %793 = vmatprep.subr.bf16.mxu0 0
        %794 = vmatpush1.bf16.msra.mxu0 %v774
        %795 = vmatprep.subr.bf16.mxu0 0
        %796 = vmatpush1.bf16.msra.mxu0 %v775
        %797 = vmatprep.subr.bf16.mxu0 0
        %798 = vmatpush1.bf16.msra.mxu0 %v776
        %799 = vmatprep.subr.bf16.mxu0 0
        %800 = vmatpush1.bf16.msra.mxu0 %v777
        %801 = vmatprep.subr.bf16.mxu0 0
        %802 = vmatpush1.bf16.msra.mxu0 %v778
        %803 = vmatprep.subr.bf16.mxu0 0
        %804 = vmatpush1.bf16.msra.mxu0 0
        %805 = vmatprep.subr.bf16.mxu0 0
        %806 = vmatpush1.bf16.msra.mxu0 0
        %807 = vmatprep.subr.bf16.mxu0 0
        %808 = vmatpush1.bf16.msra.mxu0 0
        %809 = vmatprep.subr.bf16.mxu0 0
        %810 = vmatpush1.bf16.msra.mxu0 0
        %811 = vmatprep.subr.bf16.mxu0 0
        %812 = vmatpush1.bf16.msra.mxu0 0
        %813 = vmatprep.subr.bf16.mxu0 0
        %814 = vmatpush1.bf16.msra.mxu0 0
        %815 = vmatprep.subr.bf16.mxu0 0
        %816 = vmatpush1.bf16.msra.mxu0 0
        %817 = vmatprep.subr.bf16.mxu0 0
        %818 = vmatpush1.bf16.msra.mxu0 0
        %819 = vmatprep.mubr.bf16.mxu0 0
        %820 = vmatmul.mubr.bf16.gmra.mrb[0].mxu0 %v613
        %v821 = vpop.f32.mrb[0].mxu0
        %v822 = vadd.f32 %v733, %v821
        %v823 = vpop.f32.mrb[0].mxu0
        %v824 = vpop.f32.mrb[0].mxu0
        %v825 = vadd.f32 %v736, %v824
        %v826 = vpop.f32.mrb[0].mxu0
        %827 = vdwg.mxu0
        %v828 = vld [vmem:[%s576 + $0x2] sm:$0xff]
        %v829 = vld [vmem:[%s576 + $0xa] sm:$0xff]
        %v830 = vpack.c.bf16 %v829, %v828
        %s831 = scalar_lea.vmem [#allocation5], 128
        %v832 = vld [vmem:[%s831] sm:$0xf]
        %v833 = vld [vmem:[%s831 + $0x4] sm:$0xf]
        %v834 = vld [vmem:[%s831 + $0x8] sm:$0xf]
        %v835 = vld [vmem:[%s831 + $0xc] sm:$0xf]
        %v836 = vld [vmem:[%s831 + $0x10] sm:$0xf]
        %v837 = vld [vmem:[%s831 + $0x14] sm:$0xf]
        %v838 = vld [vmem:[%s831 + $0x18] sm:$0xf]
        %v839 = vld [vmem:[%s831 + $0x1c] sm:$0xf]
        %v840 = vld [vmem:[%s831 + $0x20] sm:$0xf]
        %v841 = vld [vmem:[%s831 + $0x24] sm:$0xf]
        %v842 = vld [vmem:[%s831 + $0x28] sm:$0xf]
        %v843 = vld [vmem:[%s831 + $0x2c] sm:$0xf]
        %v844 = vld [vmem:[%s831 + $0x30] sm:$0xf]
        %v845 = vld [vmem:[%s831 + $0x34] sm:$0xf]
        %v846 = vld [vmem:[%s831 + $0x38] sm:$0xf]
        %v847 = vld [vmem:[%s831 + $0x3c] sm:$0xf]
        %v864 = vunpack.c.l.b16 %v832
        %v865 = vunpack.c.l.b16 %v833
        %v866 = vunpack.c.l.b16 %v834
        %v867 = vunpack.c.l.b16 %v835
        %v868 = vunpack.c.l.b16 %v836
        %v869 = vunpack.c.l.b16 %v837
        %v870 = vunpack.c.l.b16 %v838
        %v871 = vunpack.c.l.b16 %v839
        %v872 = vunpack.c.l.b16 %v840
        %v873 = vunpack.c.l.b16 %v841
        %v874 = vunpack.c.l.b16 %v842
        %v875 = vunpack.c.l.b16 %v843
        %v876 = vunpack.c.l.b16 %v844
        %v877 = vunpack.c.l.b16 %v845
        %v878 = vunpack.c.l.b16 %v846
        %v879 = vunpack.c.l.b16 %v847
        %v880 = vpack.c.b16 %v865, %v864
        %v881 = vpack.c.b16 %v867, %v866
        %v882 = vpack.c.b16 %v869, %v868
        %v883 = vpack.c.b16 %v871, %v870
        %v884 = vpack.c.b16 %v873, %v872
        %v885 = vpack.c.b16 %v875, %v874
        %v886 = vpack.c.b16 %v877, %v876
        %v887 = vpack.c.b16 %v879, %v878
        %896 = vmatprep.subr.bf16.mxu0 0
        %897 = vmatpush1.bf16.msra.mxu0 %v880
        %898 = vmatprep.subr.bf16.mxu0 0
        %899 = vmatpush1.bf16.msra.mxu0 %v881
        %900 = vmatprep.subr.bf16.mxu0 0
        %901 = vmatpush1.bf16.msra.mxu0 %v882
        %902 = vmatprep.subr.bf16.mxu0 0
        %903 = vmatpush1.bf16.msra.mxu0 %v883
        %904 = vmatprep.subr.bf16.mxu0 0
        %905 = vmatpush1.bf16.msra.mxu0 %v884
        %906 = vmatprep.subr.bf16.mxu0 0
        %907 = vmatpush1.bf16.msra.mxu0 %v885
        %908 = vmatprep.subr.bf16.mxu0 0
        %909 = vmatpush1.bf16.msra.mxu0 %v886
        %910 = vmatprep.subr.bf16.mxu0 0
        %911 = vmatpush1.bf16.msra.mxu0 %v887
        %912 = vmatprep.subr.bf16.mxu0 0
        %913 = vmatpush1.bf16.msra.mxu0 0
        %914 = vmatprep.subr.bf16.mxu0 0
        %915 = vmatpush1.bf16.msra.mxu0 0
        %916 = vmatprep.subr.bf16.mxu0 0
        %917 = vmatpush1.bf16.msra.mxu0 0
        %918 = vmatprep.subr.bf16.mxu0 0
        %919 = vmatpush1.bf16.msra.mxu0 0
        %920 = vmatprep.subr.bf16.mxu0 0
        %921 = vmatpush1.bf16.msra.mxu0 0
        %922 = vmatprep.subr.bf16.mxu0 0
        %923 = vmatpush1.bf16.msra.mxu0 0
        %924 = vmatprep.subr.bf16.mxu0 0
        %925 = vmatpush1.bf16.msra.mxu0 0
        %926 = vmatprep.subr.bf16.mxu0 0
        %927 = vmatpush1.bf16.msra.mxu0 0
        %928 = vmatprep.mubr.bf16.mxu0 0
        %929 = vmatmul.mubr.bf16.gmra.mrb[0].mxu0 %v830
        %v930 = vpop.f32.mrb[0].mxu0
        %v931 = vadd.f32 0.0, %v930
        %v932 = vpop.f32.mrb[0].mxu0
        %v933 = vpop.f32.mrb[0].mxu0
        %v934 = vadd.f32 0.0, %v933
        %v935 = vpop.f32.mrb[0].mxu0
        %936 = vdwg.mxu0
        %v937 = vadd.f32 %v822, %v931
        %v938 = vadd.f32 %v825, %v934
        %v939 = vld [vmem:[%s576 + $0x3] sm:$0xff]
        %v940 = vld [vmem:[%s576 + $0xb] sm:$0xff]
        %v941 = vpack.c.bf16 %v940, %v939
        %s942 = scalar_lea.vmem [#allocation5], 192
        %v943 = vld [vmem:[%s942] sm:$0xf]
        %v944 = vld [vmem:[%s942 + $0x4] sm:$0xf]
        %v945 = vld [vmem:[%s942 + $0x8] sm:$0xf]
        %v946 = vld [vmem:[%s942 + $0xc] sm:$0xf]
        %v947 = vld [vmem:[%s942 + $0x10] sm:$0xf]
        %v948 = vld [vmem:[%s942 + $0x14] sm:$0xf]
        %v949 = vld [vmem:[%s942 + $0x18] sm:$0xf]
        %v950 = vld [vmem:[%s942 + $0x1c] sm:$0xf]
        %v951 = vld [vmem:[%s942 + $0x20] sm:$0xf]
        %v952 = vld [vmem:[%s942 + $0x24] sm:$0xf]
        %v953 = vld [vmem:[%s942 + $0x28] sm:$0xf]
        %v954 = vld [vmem:[%s942 + $0x2c] sm:$0xf]
        %v955 = vld [vmem:[%s942 + $0x30] sm:$0xf]
        %v956 = vld [vmem:[%s942 + $0x34] sm:$0xf]
        %v957 = vld [vmem:[%s942 + $0x38] sm:$0xf]
        %v958 = vld [vmem:[%s942 + $0x3c] sm:$0xf]
        %v975 = vunpack.c.l.b16 %v943
        %v976 = vunpack.c.l.b16 %v944
        %v977 = vunpack.c.l.b16 %v945
        %v978 = vunpack.c.l.b16 %v946
        %v979 = vunpack.c.l.b16 %v947
        %v980 = vunpack.c.l.b16 %v948
        %v981 = vunpack.c.l.b16 %v949
        %v982 = vunpack.c.l.b16 %v950
        %v983 = vunpack.c.l.b16 %v951
        %v984 = vunpack.c.l.b16 %v952
        %v985 = vunpack.c.l.b16 %v953
        %v986 = vunpack.c.l.b16 %v954
        %v987 = vunpack.c.l.b16 %v955
        %v988 = vunpack.c.l.b16 %v956
        %v989 = vunpack.c.l.b16 %v957
        %v990 = vunpack.c.l.b16 %v958
        %v991 = vpack.c.b16 %v976, %v975
        %v992 = vpack.c.b16 %v978, %v977
        %v993 = vpack.c.b16 %v980, %v979
        %v994 = vpack.c.b16 %v982, %v981
        %v995 = vpack.c.b16 %v984, %v983
        %v996 = vpack.c.b16 %v986, %v985
        %v997 = vpack.c.b16 %v988, %v987
        %v998 = vpack.c.b16 %v990, %v989
        %1007 = vmatprep.subr.bf16.mxu0 0
        %1008 = vmatpush1.bf16.msra.mxu0 %v991
        %1009 = vmatprep.subr.bf16.mxu0 0
        %1010 = vmatpush1.bf16.msra.mxu0 %v992
        %1011 = vmatprep.subr.bf16.mxu0 0
        %1012 = vmatpush1.bf16.msra.mxu0 %v993
        %1013 = vmatprep.subr.bf16.mxu0 0
        %1014 = vmatpush1.bf16.msra.mxu0 %v994
        %1015 = vmatprep.subr.bf16.mxu0 0
        %1016 = vmatpush1.bf16.msra.mxu0 %v995
        %1017 = vmatprep.subr.bf16.mxu0 0
        %1018 = vmatpush1.bf16.msra.mxu0 %v996
        %1019 = vmatprep.subr.bf16.mxu0 0
        %1020 = vmatpush1.bf16.msra.mxu0 %v997
        %1021 = vmatprep.subr.bf16.mxu0 0
        %1022 = vmatpush1.bf16.msra.mxu0 %v998
        %1023 = vmatprep.subr.bf16.mxu0 0
        %1024 = vmatpush1.bf16.msra.mxu0 0
        %1025 = vmatprep.subr.bf16.mxu0 0
        %1026 = vmatpush1.bf16.msra.mxu0 0
        %1027 = vmatprep.subr.bf16.mxu0 0
        %1028 = vmatpush1.bf16.msra.mxu0 0
        %1029 = vmatprep.subr.bf16.mxu0 0
        %1030 = vmatpush1.bf16.msra.mxu0 0
        %1031 = vmatprep.subr.bf16.mxu0 0
        %1032 = vmatpush1.bf16.msra.mxu0 0
        %1033 = vmatprep.subr.bf16.mxu0 0
        %1034 = vmatpush1.bf16.msra.mxu0 0
        %1035 = vmatprep.subr.bf16.mxu0 0
        %1036 = vmatpush1.bf16.msra.mxu0 0
        %1037 = vmatprep.subr.bf16.mxu0 0
        %1038 = vmatpush1.bf16.msra.mxu0 0
        %1039 = vmatprep.mubr.bf16.mxu0 0
        %1040 = vmatmul.mubr.bf16.gmra.mrb[0].mxu0 %v941
        %v1041 = vpop.f32.mrb[0].mxu0
        %v1042 = vadd.f32 0.0, %v1041
        %v1043 = vpop.f32.mrb[0].mxu0
        %v1044 = vpop.f32.mrb[0].mxu0
        %v1045 = vadd.f32 0.0, %v1044
        %v1046 = vpop.f32.mrb[0].mxu0
        %1047 = vdwg.mxu0
        %v1048 = vadd.f32 %v937, %v1042
        %v1049 = vadd.f32 %v938, %v1045
        %v1050 = vld [vmem:[%s576 + $0x4] sm:$0xff]
        %v1051 = vld [vmem:[%s576 + $0xc] sm:$0xff]
        %v1052 = vpack.c.bf16 %v1051, %v1050
        %s1053 = scalar_lea.vmem [#allocation5], 256
        %v1054 = vld [vmem:[%s1053] sm:$0xf]
        %v1055 = vld [vmem:[%s1053 + $0x4] sm:$0xf]
        %v1056 = vld [vmem:[%s1053 + $0x8] sm:$0xf]
        %v1057 = vld [vmem:[%s1053 + $0xc] sm:$0xf]
        %v1058 = vld [vmem:[%s1053 + $0x10] sm:$0xf]
        %v1059 = vld [vmem:[%s1053 + $0x14] sm:$0xf]
        %v1060 = vld [vmem:[%s1053 + $0x18] sm:$0xf]
        %v1061 = vld [vmem:[%s1053 + $0x1c] sm:$0xf]
        %v1062 = vld [vmem:[%s1053 + $0x20] sm:$0xf]
        %v1063 = vld [vmem:[%s1053 + $0x24] sm:$0xf]
        %v1064 = vld [vmem:[%s1053 + $0x28] sm:$0xf]
        %v1065 = vld [vmem:[%s1053 + $0x2c] sm:$0xf]
        %v1066 = vld [vmem:[%s1053 + $0x30] sm:$0xf]
        %v1067 = vld [vmem:[%s1053 + $0x34] sm:$0xf]
        %v1068 = vld [vmem:[%s1053 + $0x38] sm:$0xf]
        %v1069 = vld [vmem:[%s1053 + $0x3c] sm:$0xf]
        %v1086 = vunpack.c.l.b16 %v1054
        %v1087 = vunpack.c.l.b16 %v1055
        %v1088 = vunpack.c.l.b16 %v1056
        %v1089 = vunpack.c.l.b16 %v1057
        %v1090 = vunpack.c.l.b16 %v1058
        %v1091 = vunpack.c.l.b16 %v1059
        %v1092 = vunpack.c.l.b16 %v1060
        %v1093 = vunpack.c.l.b16 %v1061
        %v1094 = vunpack.c.l.b16 %v1062
        %v1095 = vunpack.c.l.b16 %v1063
        %v1096 = vunpack.c.l.b16 %v1064
        %v1097 = vunpack.c.l.b16 %v1065
        %v1098 = vunpack.c.l.b16 %v1066
        %v1099 = vunpack.c.l.b16 %v1067
        %v1100 = vunpack.c.l.b16 %v1068
        %v1101 = vunpack.c.l.b16 %v1069
        %v1102 = vpack.c.b16 %v1087, %v1086
        %v1103 = vpack.c.b16 %v1089, %v1088
        %v1104 = vpack.c.b16 %v1091, %v1090
        %v1105 = vpack.c.b16 %v1093, %v1092
        %v1106 = vpack.c.b16 %v1095, %v1094
        %v1107 = vpack.c.b16 %v1097, %v1096
        %v1108 = vpack.c.b16 %v1099, %v1098
        %v1109 = vpack.c.b16 %v1101, %v1100
        %1118 = vmatprep.subr.bf16.mxu0 0
        %1119 = vmatpush1.bf16.msra.mxu0 %v1102
        %1120 = vmatprep.subr.bf16.mxu0 0
        %1121 = vmatpush1.bf16.msra.mxu0 %v1103
        %1122 = vmatprep.subr.bf16.mxu0 0
        %1123 = vmatpush1.bf16.msra.mxu0 %v1104
        %1124 = vmatprep.subr.bf16.mxu0 0
        %1125 = vmatpush1.bf16.msra.mxu0 %v1105
        %1126 = vmatprep.subr.bf16.mxu0 0
        %1127 = vmatpush1.bf16.msra.mxu0 %v1106
        %1128 = vmatprep.subr.bf16.mxu0 0
        %1129 = vmatpush1.bf16.msra.mxu0 %v1107
        %1130 = vmatprep.subr.bf16.mxu0 0
        %1131 = vmatpush1.bf16.msra.mxu0 %v1108
        %1132 = vmatprep.subr.bf16.mxu0 0
        %1133 = vmatpush1.bf16.msra.mxu0 %v1109
        %1134 = vmatprep.subr.bf16.mxu0 0
        %1135 = vmatpush1.bf16.msra.mxu0 0
        %1136 = vmatprep.subr.bf16.mxu0 0
        %1137 = vmatpush1.bf16.msra.mxu0 0
        %1138 = vmatprep.subr.bf16.mxu0 0
        %1139 = vmatpush1.bf16.msra.mxu0 0
        %1140 = vmatprep.subr.bf16.mxu0 0
        %1141 = vmatpush1.bf16.msra.mxu0 0
        %1142 = vmatprep.subr.bf16.mxu0 0
        %1143 = vmatpush1.bf16.msra.mxu0 0
        %1144 = vmatprep.subr.bf16.mxu0 0
        %1145 = vmatpush1.bf16.msra.mxu0 0
        %1146 = vmatprep.subr.bf16.mxu0 0
        %1147 = vmatpush1.bf16.msra.mxu0 0
        %1148 = vmatprep.subr.bf16.mxu0 0
        %1149 = vmatpush1.bf16.msra.mxu0 0
        %1150 = vmatprep.mubr.bf16.mxu0 0
        %1151 = vmatmul.mubr.bf16.gmra.mrb[0].mxu0 %v1052
        %v1152 = vpop.f32.mrb[0].mxu0
        %v1153 = vadd.f32 0.0, %v1152
        %v1154 = vpop.f32.mrb[0].mxu0
        %v1155 = vpop.f32.mrb[0].mxu0
        %v1156 = vadd.f32 0.0, %v1155
        %v1157 = vpop.f32.mrb[0].mxu0
        %1158 = vdwg.mxu0
        %v1159 = vadd.f32 %v1048, %v1153
        %v1160 = vadd.f32 %v1049, %v1156
        %v1162 = vlaneseq
        %v1163 = vshrl.u32 %v1162, 7
        %v1164 = vsub.s32 0, %v1163
        %v1165 = vrot.slane %v610, %v1164
        %v1167 = vadd.f32 %v1159, %v1165
        %v1168 = vadd.f32 %v1160, %v1165
        %v1169 = vld [vmem:[#allocation7] sm:$0x1]
        %v1170 = vld [vmem:[#allocation8] sm:$0x1]
        %v1171 = vadd.f32 %v1167, %v1168
        %v1172 = vrot.slane %v1171, 4
        %v1173 = vadd.f32 %v1171, %v1172
        %v1174 = vrot.slane %v1173, 2
        %v1175 = vadd.f32 %v1173, %v1174
        %v1176 = vrot.slane %v1175, 1
        %v1177 = vadd.f32 %v1175, %v1176
        %1178 = vmatprep.subr.mxu0 0.0
        %1179 = vmatpush1.msra.mxu0 %v594
        %1180 = vmatprep.subr.mxu0 0.0
        %1181 = vmatpush1.msra.mxu0 %v595
        %1182 = vmatprep.subr.mxu0 0.0
        %1183 = vmatpush1.msra.mxu0 %v596
        %1184 = vmatprep.subr.mxu0 0.0
        %1185 = vmatpush1.msra.mxu0 %v597
        %1186 = vmatprep.subr.mxu0 0.0
        %1187 = vmatpush1.msra.mxu0 %v598
        %1188 = vmatprep.subr.mxu0 0.0
        %1189 = vmatpush1.msra.mxu0 %v599
        %1190 = vmatprep.subr.mxu0 0.0
        %1191 = vmatpush1.msra.mxu0 %v600
        %1192 = vmatprep.subr.mxu0 0.0
        %1193 = vmatpush1.msra.mxu0 %v601
        %1194 = vmatprep.subr.mxu0 0.0
        %1195 = vmatpush1.msra.mxu0 %v602
        %1196 = vmatprep.subr.mxu0 0.0
        %1197 = vmatpush1.msra.mxu0 %v603
        %1198 = vmatprep.subr.mxu0 0.0
        %1199 = vmatpush1.msra.mxu0 %v604
        %1200 = vmatprep.subr.mxu0 0.0
        %1201 = vmatpush1.msra.mxu0 %v605
        %1202 = vmatprep.subr.mxu0 0.0
        %1203 = vmatpush1.msra.mxu0 %v606
        %1204 = vmatprep.subr.mxu0 0.0
        %1205 = vmatpush1.msra.mxu0 %v607
        %1206 = vmatprep.subr.mxu0 0.0
        %1207 = vmatpush1.msra.mxu0 %v608
        %1208 = vmatprep.subr.mxu0 0.0
        %1209 = vmatpush1.msra.mxu0 %v609
        %1210 = vmatprep.subr.mxu0 0.0
        %1211 = vmatpush1.msra.mxu0 0.0
        %1212 = vmatprep.subr.mxu0 0.0
        %1213 = vmatpush1.msra.mxu0 0.0
        %1214 = vmatprep.subr.mxu0 0.0
        %1215 = vmatpush1.msra.mxu0 0.0
        %1216 = vmatprep.subr.mxu0 0.0
        %1217 = vmatpush1.msra.mxu0 0.0
        %1218 = vmatprep.subr.mxu0 0.0
        %1219 = vmatpush1.msra.mxu0 0.0
        %1220 = vmatprep.subr.mxu0 0.0
        %1221 = vmatpush1.msra.mxu0 0.0
        %1222 = vmatprep.subr.mxu0 0.0
        %1223 = vmatpush1.msra.mxu0 0.0
        %1224 = vmatprep.subr.mxu0 0.0
        %1225 = vmatpush1.msra.mxu0 0.0
        %1226 = vmatprep.subr.mxu0 0.0
        %1227 = vmatpush1.msra.mxu0 0.0
        %1228 = vmatprep.subr.mxu0 0.0
        %1229 = vmatpush1.msra.mxu0 0.0
        %1230 = vmatprep.subr.mxu0 0.0
        %1231 = vmatpush1.msra.mxu0 0.0
        %1232 = vmatprep.subr.mxu0 0.0
        %1233 = vmatpush1.msra.mxu0 0.0
        %1234 = vmatprep.subr.mxu0 0.0
        %1235 = vmatpush1.msra.mxu0 0.0
        %1236 = vmatprep.subr.mxu0 0.0
        %1237 = vmatpush1.msra.mxu0 0.0
        %1238 = vmatprep.subr.mxu0 0.0
        %1239 = vmatpush1.msra.mxu0 0.0
        %1240 = vmatprep.subr.mxu0 0.0
        %1241 = vmatpush1.msra.mxu0 0.0
        %1242 = vmatprep.mubr.f32.mxu0 0.0
        %1243 = vmatmul.mubr.f32.gmra.mrb[0].mxu0 %v1177
        %v1244 = vpop.f32.mrb[0].mxu0
        %v1245 = vadd.f32 0.0, %v1244
        %v1246 = vpop.f32.mrb[0].mxu0
        %1247 = vdwg.mxu0
        %v1248 = vmul.f32 %v1245, 0.03125
        %v1249 = vlaneseq
        %v1250 = vshrl.u32 %v1249, 7
        %v1251 = vsub.s32 0, %v1250
        %v1252 = vrot.slane %v1248, %v1251
        %v1253 = vsub.f32 %v1167, %v1252
        %v1254 = vsub.f32 %v1168, %v1252
        %v1255 = vmul.f32 %v1253, %v1253
        %v1256 = vmul.f32 %v1254, %v1254
        %v1257 = vadd.f32 %v1255, %v1256
        %v1258 = vrot.slane %v1257, 4
        %v1259 = vadd.f32 %v1257, %v1258
        %v1260 = vrot.slane %v1259, 2
        %v1261 = vadd.f32 %v1259, %v1260
        %v1262 = vrot.slane %v1261, 1
        %v1263 = vadd.f32 %v1261, %v1262
        %1264 = vmatprep.subr.mxu0 0.0
        %1265 = vmatpush1.msra.mxu0 %v594
        %1266 = vmatprep.subr.mxu0 0.0
        %1267 = vmatpush1.msra.mxu0 %v595
        %1268 = vmatprep.subr.mxu0 0.0
        %1269 = vmatpush1.msra.mxu0 %v596
        %1270 = vmatprep.subr.mxu0 0.0
        %1271 = vmatpush1.msra.mxu0 %v597
        %1272 = vmatprep.subr.mxu0 0.0
        %1273 = vmatpush1.msra.mxu0 %v598
        %1274 = vmatprep.subr.mxu0 0.0
        %1275 = vmatpush1.msra.mxu0 %v599
        %1276 = vmatprep.subr.mxu0 0.0
        %1277 = vmatpush1.msra.mxu0 %v600
        %1278 = vmatprep.subr.mxu0 0.0
        %1279 = vmatpush1.msra.mxu0 %v601
        %1280 = vmatprep.subr.mxu0 0.0
        %1281 = vmatpush1.msra.mxu0 %v602
        %1282 = vmatprep.subr.mxu0 0.0
        %1283 = vmatpush1.msra.mxu0 %v603
        %1284 = vmatprep.subr.mxu0 0.0
        %1285 = vmatpush1.msra.mxu0 %v604
        %1286 = vmatprep.subr.mxu0 0.0
        %1287 = vmatpush1.msra.mxu0 %v605
        %1288 = vmatprep.subr.mxu0 0.0
        %1289 = vmatpush1.msra.mxu0 %v606
        %1290 = vmatprep.subr.mxu0 0.0
        %1291 = vmatpush1.msra.mxu0 %v607
        %1292 = vmatprep.subr.mxu0 0.0
        %1293 = vmatpush1.msra.mxu0 %v608
        %1294 = vmatprep.subr.mxu0 0.0
        %1295 = vmatpush1.msra.mxu0 %v609
        %1296 = vmatprep.subr.mxu0 0.0
        %1297 = vmatpush1.msra.mxu0 0.0
        %1298 = vmatprep.subr.mxu0 0.0
        %1299 = vmatpush1.msra.mxu0 0.0
        %1300 = vmatprep.subr.mxu0 0.0
        %1301 = vmatpush1.msra.mxu0 0.0
        %1302 = vmatprep.subr.mxu0 0.0
        %1303 = vmatpush1.msra.mxu0 0.0
        %1304 = vmatprep.subr.mxu0 0.0
        %1305 = vmatpush1.msra.mxu0 0.0
        %1306 = vmatprep.subr.mxu0 0.0
        %1307 = vmatpush1.msra.mxu0 0.0
        %1308 = vmatprep.subr.mxu0 0.0
        %1309 = vmatpush1.msra.mxu0 0.0
        %1310 = vmatprep.subr.mxu0 0.0
        %1311 = vmatpush1.msra.mxu0 0.0
        %1312 = vmatprep.subr.mxu0 0.0
        %1313 = vmatpush1.msra.mxu0 0.0
        %1314 = vmatprep.subr.mxu0 0.0
        %1315 = vmatpush1.msra.mxu0 0.0
        %1316 = vmatprep.subr.mxu0 0.0
        %1317 = vmatpush1.msra.mxu0 0.0
        %1318 = vmatprep.subr.mxu0 0.0
        %1319 = vmatpush1.msra.mxu0 0.0
        %1320 = vmatprep.subr.mxu0 0.0
        %1321 = vmatpush1.msra.mxu0 0.0
        %1322 = vmatprep.subr.mxu0 0.0
        %1323 = vmatpush1.msra.mxu0 0.0
        %1324 = vmatprep.subr.mxu0 0.0
        %1325 = vmatpush1.msra.mxu0 0.0
        %1326 = vmatprep.subr.mxu0 0.0
        %1327 = vmatpush1.msra.mxu0 0.0
        %1328 = vmatprep.mubr.f32.mxu0 0.0
        %1329 = vmatmul.mubr.f32.gmra.mrb[0].mxu0 %v1263
        %v1330 = vpop.f32.mrb[0].mxu0
        %v1331 = vadd.f32 0.0, %v1330
        %v1332 = vpop.f32.mrb[0].mxu0
        %1333 = vdwg.mxu0
        %v1334 = vmul.f32 %v1331, 0.03125
        %v1335 = vadd.f32 %v1334, 1e-05
        %v1336 = vrsqrt.pop %v1335
        %v1337 = vlaneseq
        %v1338 = vshrl.u32 %v1337, 7
        %v1339 = vsub.s32 0, %v1338
        %v1340 = vrot.slane %v1336, %v1339
        %v1341 = vmul.f32 %v1253, %v1340
        %v1342 = vmul.f32 %v1254, %v1340
        %v1344 = vlaneseq
        %v1345 = vshrl.u32 %v1344, 7
        %v1346 = vsub.s32 0, %v1345
        %v1347 = vrot.slane %v1169, %v1346
        %v1349 = vmul.f32 %v1341, %v1347
        %v1350 = vmul.f32 %v1342, %v1347
        %v1352 = vlaneseq
        %v1353 = vshrl.u32 %v1352, 7
        %v1354 = vsub.s32 0, %v1353
        %v1355 = vrot.slane %v1170, %v1354
        %v1357 = vadd.f32 %v1349, %v1355
        %v1358 = vadd.f32 %v1350, %v1355
        %v1359 = vmin.f32 %v1357, 20.0
        %v1360 = vmin.f32 %v1358, 20.0
        %v1361 = vmul.f32 %v1359, 1.442695
        %v1362 = vpow.pop %v1361
        %v1363 = vmul.f32 %v1360, 1.442695
        %v1364 = vpow.pop %v1363
        %v1365 = vadd.f32 %v1362, 2.0
        %v1366 = vadd.f32 %v1364, 2.0
        %v1367 = vmul.f32 %v1362, %v1365
        %v1368 = vmul.f32 %v1364, %v1366
        %v1369 = vmul.f32 %v1357, %v1367
        %v1370 = vmul.f32 %v1358, %v1368
        %v1371 = vadd.f32 %v1367, 2.0
        %v1372 = vadd.f32 %v1368, 2.0
        %v1373 = vrcp.pop %v1371
        %v1374 = vrcp.pop %v1372
        %v1375 = vmul.f32 %v1369, %v1373
        %v1376 = vmul.f32 %v1370, %v1374
        %v1377 = vld [vmem:[%s493] sm:$0x1]
        %v1379 = vlaneseq
        %v1380 = vshrl.u32 %v1379, 7
        %v1381 = vsub.s32 0, %v1380
        %v1382 = vrot.slane %v1377, %v1381
        %v1384 = vadd.f32 %v1375, %v1382
        %v1385 = vadd.f32 %v1376, %v1382
        %v1386 = vpack.c.bf16 %v1385, %v1384
        %v1388 = vrot.slane %v1386, 7
        %vm1389 = vcmask 1040384
        %v1392 = vsel %vm1389, 0, %v1388
        %v1394 = vsel %vm1389, %v1388, 0
        %v1395 = vld [vmem:[#allocation11] sm:$0x1]
        %v1396 = vld [vmem:[#allocation10] sm:$0xf]
        %v1397 = vld [vmem:[#allocation10 + $0x4] sm:$0xf]
        %v1398 = vld [vmem:[#allocation10 + $0x8] sm:$0xf]
        %v1399 = vld [vmem:[#allocation10 + $0xc] sm:$0xf]
        %v1400 = vld [vmem:[#allocation10 + $0x10] sm:$0xf]
        %v1401 = vld [vmem:[#allocation10 + $0x14] sm:$0xf]
        %v1402 = vld [vmem:[#allocation10 + $0x18] sm:$0xf]
        %v1403 = vld [vmem:[#allocation10 + $0x1c] sm:$0xf]
        %v1404 = vld [vmem:[#allocation10 + $0x20] sm:$0xf]
        %v1405 = vld [vmem:[#allocation10 + $0x24] sm:$0xf]
        %v1406 = vld [vmem:[#allocation10 + $0x28] sm:$0xf]
        %v1407 = vld [vmem:[#allocation10 + $0x2c] sm:$0xf]
        %v1408 = vld [vmem:[#allocation10 + $0x30] sm:$0xf]
        %v1409 = vld [vmem:[#allocation10 + $0x34] sm:$0xf]
        %v1410 = vld [vmem:[#allocation10 + $0x38] sm:$0xf]
        %v1411 = vld [vmem:[#allocation10 + $0x3c] sm:$0xf]
        %s1412 = scalar_lea.vmem [#allocation10], 64
        %v1413 = vld [vmem:[%s1412] sm:$0xf]
        %v1414 = vld [vmem:[%s1412 + $0x4] sm:$0xf]
        %v1415 = vld [vmem:[%s1412 + $0x8] sm:$0xf]
        %v1416 = vld [vmem:[%s1412 + $0xc] sm:$0xf]
        %v1417 = vld [vmem:[%s1412 + $0x10] sm:$0xf]
        %v1418 = vld [vmem:[%s1412 + $0x14] sm:$0xf]
        %v1419 = vld [vmem:[%s1412 + $0x18] sm:$0xf]
        %v1420 = vld [vmem:[%s1412 + $0x1c] sm:$0xf]
        %v1421 = vld [vmem:[%s1412 + $0x20] sm:$0xf]
        %v1422 = vld [vmem:[%s1412 + $0x24] sm:$0xf]
        %v1423 = vld [vmem:[%s1412 + $0x28] sm:$0xf]
        %v1424 = vld [vmem:[%s1412 + $0x2c] sm:$0xf]
        %v1425 = vld [vmem:[%s1412 + $0x30] sm:$0xf]
        %v1426 = vld [vmem:[%s1412 + $0x34] sm:$0xf]
        %v1427 = vld [vmem:[%s1412 + $0x38] sm:$0xf]
        %v1428 = vld [vmem:[%s1412 + $0x3c] sm:$0xf]
        %vm1429 = vsmask.f32 7424
        %v1430 = vshrl.u32 %v1392, 16
        %v1432 = vshll.u32 %v1392, 16
        %v1434 = vrot.slane %v1432, 1
        %v1435 = vor.u32 %v1430, %v1434
        %v1436 = vshll.u32 %v1394, 16
        %v1438 = vrot.slane %v1436, 1
        %v1439 = vsel %vm1429, %v1435, %v1438
        %v1457 = vunpack.c.l.b16 %v1413
        %v1458 = vunpack.c.l.b16 %v1414
        %v1459 = vunpack.c.l.b16 %v1415
        %v1460 = vunpack.c.l.b16 %v1416
        %v1461 = vunpack.c.l.b16 %v1417
        %v1462 = vunpack.c.l.b16 %v1418
        %v1463 = vunpack.c.l.b16 %v1419
        %v1464 = vunpack.c.l.b16 %v1420
        %v1465 = vunpack.c.l.b16 %v1421
        %v1466 = vunpack.c.l.b16 %v1422
        %v1467 = vunpack.c.l.b16 %v1423
        %v1468 = vunpack.c.l.b16 %v1424
        %v1469 = vunpack.c.l.b16 %v1425
        %v1470 = vunpack.c.l.b16 %v1426
        %v1471 = vunpack.c.l.b16 %v1427
        %v1472 = vunpack.c.l.b16 %v1428
        %v1473 = vpack.c.b16 %v1458, %v1457
        %v1474 = vpack.c.b16 %v1460, %v1459
        %v1475 = vpack.c.b16 %v1462, %v1461
        %v1476 = vpack.c.b16 %v1464, %v1463
        %v1477 = vpack.c.b16 %v1466, %v1465
        %v1478 = vpack.c.b16 %v1468, %v1467
        %v1479 = vpack.c.b16 %v1470, %v1469
        %v1480 = vpack.c.b16 %v1472, %v1471
        %1489 = vmatprep.subr.bf16.mxu0 0
        %1490 = vmatpush1.bf16.msra.mxu0 %v1473
        %1491 = vmatprep.subr.bf16.mxu0 0
        %1492 = vmatpush1.bf16.msra.mxu0 %v1474
        %1493 = vmatprep.subr.bf16.mxu0 0
        %1494 = vmatpush1.bf16.msra.mxu0 %v1475
        %1495 = vmatprep.subr.bf16.mxu0 0
        %1496 = vmatpush1.bf16.msra.mxu0 %v1476
        %1497 = vmatprep.subr.bf16.mxu0 0
        %1498 = vmatpush1.bf16.msra.mxu0 %v1477
        %1499 = vmatprep.subr.bf16.mxu0 0
        %1500 = vmatpush1.bf16.msra.mxu0 %v1478
        %1501 = vmatprep.subr.bf16.mxu0 0
        %1502 = vmatpush1.bf16.msra.mxu0 %v1479
        %1503 = vmatprep.subr.bf16.mxu0 0
        %1504 = vmatpush1.bf16.msra.mxu0 %v1480
        %1505 = vmatprep.subr.bf16.mxu0 0
        %1506 = vmatpush1.bf16.msra.mxu0 0
        %1507 = vmatprep.subr.bf16.mxu0 0
        %1508 = vmatpush1.bf16.msra.mxu0 0
        %1509 = vmatprep.subr.bf16.mxu0 0
        %1510 = vmatpush1.bf16.msra.mxu0 0
        %1511 = vmatprep.subr.bf16.mxu0 0
        %1512 = vmatpush1.bf16.msra.mxu0 0
        %1513 = vmatprep.subr.bf16.mxu0 0
        %1514 = vmatpush1.bf16.msra.mxu0 0
        %1515 = vmatprep.subr.bf16.mxu0 0
        %1516 = vmatpush1.bf16.msra.mxu0 0
        %1517 = vmatprep.subr.bf16.mxu0 0
        %1518 = vmatpush1.bf16.msra.mxu0 0
        %1519 = vmatprep.subr.bf16.mxu0 0
        %1520 = vmatpush1.bf16.msra.mxu0 0
        %1521 = vmatprep.mubr.bf16.mxu0 0
        %1522 = vmatmul.mubr.bf16.gmra.mrb[0].mxu0 %v1439
        %v1523 = vpop.f32.mrb[0].mxu0
        %v1524 = vadd.f32 0.0, %v1523
        %v1525 = vpop.f32.mrb[0].mxu0
        %v1526 = vpop.f32.mrb[0].mxu0
        %v1527 = vadd.f32 0.0, %v1526
        %v1528 = vpop.f32.mrb[0].mxu0
        %1529 = vdwg.mxu0
        %v1546 = vunpack.c.l.b16 %v1396
        %v1547 = vunpack.c.l.b16 %v1397
        %v1548 = vunpack.c.l.b16 %v1398
        %v1549 = vunpack.c.l.b16 %v1399
        %v1550 = vunpack.c.l.b16 %v1400
        %v1551 = vunpack.c.l.b16 %v1401
        %v1552 = vunpack.c.l.b16 %v1402
        %v1553 = vunpack.c.l.b16 %v1403
        %v1554 = vunpack.c.l.b16 %v1404
        %v1555 = vunpack.c.l.b16 %v1405
        %v1556 = vunpack.c.l.b16 %v1406
        %v1557 = vunpack.c.l.b16 %v1407
        %v1558 = vunpack.c.l.b16 %v1408
        %v1559 = vunpack.c.l.b16 %v1409
        %v1560 = vunpack.c.l.b16 %v1410
        %v1561 = vunpack.c.l.b16 %v1411
        %v1562 = vpack.c.b16 %v1547, %v1546
        %v1563 = vpack.c.b16 %v1549, %v1548
        %v1564 = vpack.c.b16 %v1551, %v1550
        %v1565 = vpack.c.b16 %v1553, %v1552
        %v1566 = vpack.c.b16 %v1555, %v1554
        %v1567 = vpack.c.b16 %v1557, %v1556
        %v1568 = vpack.c.b16 %v1559, %v1558
        %v1569 = vpack.c.b16 %v1561, %v1560
        %1578 = vmatprep.subr.bf16.mxu0 0
        %1579 = vmatpush1.bf16.msra.mxu0 %v1562
        %1580 = vmatprep.subr.bf16.mxu0 0
        %1581 = vmatpush1.bf16.msra.mxu0 %v1563
        %1582 = vmatprep.subr.bf16.mxu0 0
        %1583 = vmatpush1.bf16.msra.mxu0 %v1564
        %1584 = vmatprep.subr.bf16.mxu0 0
        %1585 = vmatpush1.bf16.msra.mxu0 %v1565
        %1586 = vmatprep.subr.bf16.mxu0 0
        %1587 = vmatpush1.bf16.msra.mxu0 %v1566
        %1588 = vmatprep.subr.bf16.mxu0 0
        %1589 = vmatpush1.bf16.msra.mxu0 %v1567
        %1590 = vmatprep.subr.bf16.mxu0 0
        %1591 = vmatpush1.bf16.msra.mxu0 %v1568
        %1592 = vmatprep.subr.bf16.mxu0 0
        %1593 = vmatpush1.bf16.msra.mxu0 %v1569
        %1594 = vmatprep.subr.bf16.mxu0 0
        %1595 = vmatpush1.bf16.msra.mxu0 0
        %1596 = vmatprep.subr.bf16.mxu0 0
        %1597 = vmatpush1.bf16.msra.mxu0 0
        %1598 = vmatprep.subr.bf16.mxu0 0
        %1599 = vmatpush1.bf16.msra.mxu0 0
        %1600 = vmatprep.subr.bf16.mxu0 0
        %1601 = vmatpush1.bf16.msra.mxu0 0
        %1602 = vmatprep.subr.bf16.mxu0 0
        %1603 = vmatpush1.bf16.msra.mxu0 0
        %1604 = vmatprep.subr.bf16.mxu0 0
        %1605 = vmatpush1.bf16.msra.mxu0 0
        %1606 = vmatprep.subr.bf16.mxu0 0
        %1607 = vmatpush1.bf16.msra.mxu0 0
        %1608 = vmatprep.subr.bf16.mxu0 0
        %1609 = vmatpush1.bf16.msra.mxu0 0
        %1610 = vmatprep.mubr.bf16.mxu0 0
        %1611 = vmatmul.mubr.bf16.gmra.mrb[0].mxu0 %v1392
        %v1612 = vpop.f32.mrb[0].mxu0
        %v1613 = vadd.f32 %v1524, %v1612
        %v1614 = vpop.f32.mrb[0].mxu0
        %v1615 = vpop.f32.mrb[0].mxu0
        %v1616 = vadd.f32 %v1527, %v1615
        %v1617 = vpop.f32.mrb[0].mxu0
        %1618 = vdwg.mxu0
        %s1619 = scalar_lea.vmem [#allocation10], 128
        %v1620 = vld [vmem:[%s1619] sm:$0xf]
        %v1621 = vld [vmem:[%s1619 + $0x4] sm:$0xf]
        %v1622 = vld [vmem:[%s1619 + $0x8] sm:$0xf]
        %v1623 = vld [vmem:[%s1619 + $0xc] sm:$0xf]
        %v1624 = vld [vmem:[%s1619 + $0x10] sm:$0xf]
        %v1625 = vld [vmem:[%s1619 + $0x14] sm:$0xf]
        %v1626 = vld [vmem:[%s1619 + $0x18] sm:$0xf]
        %v1627 = vld [vmem:[%s1619 + $0x1c] sm:$0xf]
        %v1628 = vld [vmem:[%s1619 + $0x20] sm:$0xf]
        %v1629 = vld [vmem:[%s1619 + $0x24] sm:$0xf]
        %v1630 = vld [vmem:[%s1619 + $0x28] sm:$0xf]
        %v1631 = vld [vmem:[%s1619 + $0x2c] sm:$0xf]
        %v1632 = vld [vmem:[%s1619 + $0x30] sm:$0xf]
        %v1633 = vld [vmem:[%s1619 + $0x34] sm:$0xf]
        %v1634 = vld [vmem:[%s1619 + $0x38] sm:$0xf]
        %v1635 = vld [vmem:[%s1619 + $0x3c] sm:$0xf]
        %vm1638 = vcmask 1046528
        %v1639 = vrot.slane %v1392, 1
        %v1640 = vrot.slane %v1394, 1
        %v1641 = vsel %vm1638, %v1639, %v1640
        %v1659 = vunpack.c.l.b16 %v1620
        %v1660 = vunpack.c.l.b16 %v1621
        %v1661 = vunpack.c.l.b16 %v1622
        %v1662 = vunpack.c.l.b16 %v1623
        %v1663 = vunpack.c.l.b16 %v1624
        %v1664 = vunpack.c.l.b16 %v1625
        %v1665 = vunpack.c.l.b16 %v1626
        %v1666 = vunpack.c.l.b16 %v1627
        %v1667 = vunpack.c.l.b16 %v1628
        %v1668 = vunpack.c.l.b16 %v1629
        %v1669 = vunpack.c.l.b16 %v1630
        %v1670 = vunpack.c.l.b16 %v1631
        %v1671 = vunpack.c.l.b16 %v1632
        %v1672 = vunpack.c.l.b16 %v1633
        %v1673 = vunpack.c.l.b16 %v1634
        %v1674 = vunpack.c.l.b16 %v1635
        %v1675 = vpack.c.b16 %v1660, %v1659
        %v1676 = vpack.c.b16 %v1662, %v1661
        %v1677 = vpack.c.b16 %v1664, %v1663
        %v1678 = vpack.c.b16 %v1666, %v1665
        %v1679 = vpack.c.b16 %v1668, %v1667
        %v1680 = vpack.c.b16 %v1670, %v1669
        %v1681 = vpack.c.b16 %v1672, %v1671
        %v1682 = vpack.c.b16 %v1674, %v1673
        %1691 = vmatprep.subr.bf16.mxu0 0
        %1692 = vmatpush1.bf16.msra.mxu0 %v1675
        %1693 = vmatprep.subr.bf16.mxu0 0
        %1694 = vmatpush1.bf16.msra.mxu0 %v1676
        %1695 = vmatprep.subr.bf16.mxu0 0
        %1696 = vmatpush1.bf16.msra.mxu0 %v1677
        %1697 = vmatprep.subr.bf16.mxu0 0
        %1698 = vmatpush1.bf16.msra.mxu0 %v1678
        %1699 = vmatprep.subr.bf16.mxu0 0
        %1700 = vmatpush1.bf16.msra.mxu0 %v1679
        %1701 = vmatprep.subr.bf16.mxu0 0
        %1702 = vmatpush1.bf16.msra.mxu0 %v1680
        %1703 = vmatprep.subr.bf16.mxu0 0
        %1704 = vmatpush1.bf16.msra.mxu0 %v1681
        %1705 = vmatprep.subr.bf16.mxu0 0
        %1706 = vmatpush1.bf16.msra.mxu0 %v1682
        %1707 = vmatprep.subr.bf16.mxu0 0
        %1708 = vmatpush1.bf16.msra.mxu0 0
        %1709 = vmatprep.subr.bf16.mxu0 0
        %1710 = vmatpush1.bf16.msra.mxu0 0
        %1711 = vmatprep.subr.bf16.mxu0 0
        %1712 = vmatpush1.bf16.msra.mxu0 0
        %1713 = vmatprep.subr.bf16.mxu0 0
        %1714 = vmatpush1.bf16.msra.mxu0 0
        %1715 = vmatprep.subr.bf16.mxu0 0
        %1716 = vmatpush1.bf16.msra.mxu0 0
        %1717 = vmatprep.subr.bf16.mxu0 0
        %1718 = vmatpush1.bf16.msra.mxu0 0
        %1719 = vmatprep.subr.bf16.mxu0 0
        %1720 = vmatpush1.bf16.msra.mxu0 0
        %1721 = vmatprep.subr.bf16.mxu0 0
        %1722 = vmatpush1.bf16.msra.mxu0 0
        %1723 = vmatprep.mubr.bf16.mxu0 0
        %1724 = vmatmul.mubr.bf16.gmra.mrb[0].mxu0 %v1641
        %v1725 = vpop.f32.mrb[0].mxu0
        %v1726 = vadd.f32 0.0, %v1725
        %v1727 = vpop.f32.mrb[0].mxu0
        %v1728 = vpop.f32.mrb[0].mxu0
        %v1729 = vadd.f32 0.0, %v1728
        %v1730 = vpop.f32.mrb[0].mxu0
        %1731 = vdwg.mxu0
        %v1732 = vadd.f32 %v1613, %v1726
        %v1733 = vadd.f32 %v1616, %v1729
        %s1734 = scalar_lea.vmem [#allocation10], 192
        %v1735 = vld [vmem:[%s1734] sm:$0xf]
        %v1736 = vld [vmem:[%s1734 + $0x4] sm:$0xf]
        %v1737 = vld [vmem:[%s1734 + $0x8] sm:$0xf]
        %v1738 = vld [vmem:[%s1734 + $0xc] sm:$0xf]
        %v1739 = vld [vmem:[%s1734 + $0x10] sm:$0xf]
        %v1740 = vld [vmem:[%s1734 + $0x14] sm:$0xf]
        %v1741 = vld [vmem:[%s1734 + $0x18] sm:$0xf]
        %v1742 = vld [vmem:[%s1734 + $0x1c] sm:$0xf]
        %v1743 = vld [vmem:[%s1734 + $0x20] sm:$0xf]
        %v1744 = vld [vmem:[%s1734 + $0x24] sm:$0xf]
        %v1745 = vld [vmem:[%s1734 + $0x28] sm:$0xf]
        %v1746 = vld [vmem:[%s1734 + $0x2c] sm:$0xf]
        %v1747 = vld [vmem:[%s1734 + $0x30] sm:$0xf]
        %v1748 = vld [vmem:[%s1734 + $0x34] sm:$0xf]
        %v1749 = vld [vmem:[%s1734 + $0x38] sm:$0xf]
        %v1750 = vld [vmem:[%s1734 + $0x3c] sm:$0xf]
        %vm1751 = vsmask.f32 6400
        %v1752 = vrot.slane %v1430, 1
        %v1753 = vrot.slane %v1432, 2
        %v1754 = vor.u32 %v1752, %v1753
        %v1755 = vshrl.u32 %v1394, 16
        %v1757 = vrot.slane %v1755, 1
        %v1758 = vrot.slane %v1436, 2
        %v1759 = vor.u32 %v1757, %v1758
        %v1760 = vsel %vm1751, %v1754, %v1759
        %v1778 = vunpack.c.l.b16 %v1735
        %v1779 = vunpack.c.l.b16 %v1736
        %v1780 = vunpack.c.l.b16 %v1737
        %v1781 = vunpack.c.l.b16 %v1738
        %v1782 = vunpack.c.l.b16 %v1739
        %v1783 = vunpack.c.l.b16 %v1740
        %v1784 = vunpack.c.l.b16 %v1741
        %v1785 = vunpack.c.l.b16 %v1742
        %v1786 = vunpack.c.l.b16 %v1743
        %v1787 = vunpack.c.l.b16 %v1744
        %v1788 = vunpack.c.l.b16 %v1745
        %v1789 = vunpack.c.l.b16 %v1746
        %v1790 = vunpack.c.l.b16 %v1747
        %v1791 = vunpack.c.l.b16 %v1748
        %v1792 = vunpack.c.l.b16 %v1749
        %v1793 = vunpack.c.l.b16 %v1750
        %v1794 = vpack.c.b16 %v1779, %v1778
        %v1795 = vpack.c.b16 %v1781, %v1780
        %v1796 = vpack.c.b16 %v1783, %v1782
        %v1797 = vpack.c.b16 %v1785, %v1784
        %v1798 = vpack.c.b16 %v1787, %v1786
        %v1799 = vpack.c.b16 %v1789, %v1788
        %v1800 = vpack.c.b16 %v1791, %v1790
        %v1801 = vpack.c.b16 %v1793, %v1792
        %1810 = vmatprep.subr.bf16.mxu0 0
        %1811 = vmatpush1.bf16.msra.mxu0 %v1794
        %1812 = vmatprep.subr.bf16.mxu0 0
        %1813 = vmatpush1.bf16.msra.mxu0 %v1795
        %1814 = vmatprep.subr.bf16.mxu0 0
        %1815 = vmatpush1.bf16.msra.mxu0 %v1796
        %1816 = vmatprep.subr.bf16.mxu0 0
        %1817 = vmatpush1.bf16.msra.mxu0 %v1797
        %1818 = vmatprep.subr.bf16.mxu0 0
        %1819 = vmatpush1.bf16.msra.mxu0 %v1798
        %1820 = vmatprep.subr.bf16.mxu0 0
        %1821 = vmatpush1.bf16.msra.mxu0 %v1799
        %1822 = vmatprep.subr.bf16.mxu0 0
        %1823 = vmatpush1.bf16.msra.mxu0 %v1800
        %1824 = vmatprep.subr.bf16.mxu0 0
        %1825 = vmatpush1.bf16.msra.mxu0 %v1801
        %1826 = vmatprep.subr.bf16.mxu0 0
        %1827 = vmatpush1.bf16.msra.mxu0 0
        %1828 = vmatprep.subr.bf16.mxu0 0
        %1829 = vmatpush1.bf16.msra.mxu0 0
        %1830 = vmatprep.subr.bf16.mxu0 0
        %1831 = vmatpush1.bf16.msra.mxu0 0
        %1832 = vmatprep.subr.bf16.mxu0 0
        %1833 = vmatpush1.bf16.msra.mxu0 0
        %1834 = vmatprep.subr.bf16.mxu0 0
        %1835 = vmatpush1.bf16.msra.mxu0 0
        %1836 = vmatprep.subr.bf16.mxu0 0
        %1837 = vmatpush1.bf16.msra.mxu0 0
        %1838 = vmatprep.subr.bf16.mxu0 0
        %1839 = vmatpush1.bf16.msra.mxu0 0
        %1840 = vmatprep.subr.bf16.mxu0 0
        %1841 = vmatpush1.bf16.msra.mxu0 0
        %1842 = vmatprep.mubr.bf16.mxu0 0
        %1843 = vmatmul.mubr.bf16.gmra.mrb[0].mxu0 %v1760
        %v1844 = vpop.f32.mrb[0].mxu0
        %v1845 = vadd.f32 0.0, %v1844
        %v1846 = vpop.f32.mrb[0].mxu0
        %v1847 = vpop.f32.mrb[0].mxu0
        %v1848 = vadd.f32 0.0, %v1847
        %v1849 = vpop.f32.mrb[0].mxu0
        %1850 = vdwg.mxu0
        %v1851 = vadd.f32 %v1732, %v1845
        %v1852 = vadd.f32 %v1733, %v1848
        %s1853 = scalar_lea.vmem [#allocation10], 256
        %v1854 = vld [vmem:[%s1853] sm:$0xf]
        %v1855 = vld [vmem:[%s1853 + $0x4] sm:$0xf]
        %v1856 = vld [vmem:[%s1853 + $0x8] sm:$0xf]
        %v1857 = vld [vmem:[%s1853 + $0xc] sm:$0xf]
        %v1858 = vld [vmem:[%s1853 + $0x10] sm:$0xf]
        %v1859 = vld [vmem:[%s1853 + $0x14] sm:$0xf]
        %v1860 = vld [vmem:[%s1853 + $0x18] sm:$0xf]
        %v1861 = vld [vmem:[%s1853 + $0x1c] sm:$0xf]
        %v1862 = vld [vmem:[%s1853 + $0x20] sm:$0xf]
        %v1863 = vld [vmem:[%s1853 + $0x24] sm:$0xf]
        %v1864 = vld [vmem:[%s1853 + $0x28] sm:$0xf]
        %v1865 = vld [vmem:[%s1853 + $0x2c] sm:$0xf]
        %v1866 = vld [vmem:[%s1853 + $0x30] sm:$0xf]
        %v1867 = vld [vmem:[%s1853 + $0x34] sm:$0xf]
        %v1868 = vld [vmem:[%s1853 + $0x38] sm:$0xf]
        %v1869 = vld [vmem:[%s1853 + $0x3c] sm:$0xf]
        %vm1870 = vcmask 1045504
        %v1871 = vrot.slane %v1392, 2
        %v1872 = vrot.slane %v1394, 2
        %v1873 = vsel %vm1870, %v1871, %v1872
        %v1891 = vunpack.c.l.b16 %v1854
        %v1892 = vunpack.c.l.b16 %v1855
        %v1893 = vunpack.c.l.b16 %v1856
        %v1894 = vunpack.c.l.b16 %v1857
        %v1895 = vunpack.c.l.b16 %v1858
        %v1896 = vunpack.c.l.b16 %v1859
        %v1897 = vunpack.c.l.b16 %v1860
        %v1898 = vunpack.c.l.b16 %v1861
        %v1899 = vunpack.c.l.b16 %v1862
        %v1900 = vunpack.c.l.b16 %v1863
        %v1901 = vunpack.c.l.b16 %v1864
        %v1902 = vunpack.c.l.b16 %v1865
        %v1903 = vunpack.c.l.b16 %v1866
        %v1904 = vunpack.c.l.b16 %v1867
        %v1905 = vunpack.c.l.b16 %v1868
        %v1906 = vunpack.c.l.b16 %v1869
        %v1907 = vpack.c.b16 %v1892, %v1891
        %v1908 = vpack.c.b16 %v1894, %v1893
        %v1909 = vpack.c.b16 %v1896, %v1895
        %v1910 = vpack.c.b16 %v1898, %v1897
        %v1911 = vpack.c.b16 %v1900, %v1899
        %v1912 = vpack.c.b16 %v1902, %v1901
        %v1913 = vpack.c.b16 %v1904, %v1903
        %v1914 = vpack.c.b16 %v1906, %v1905
        %1923 = vmatprep.subr.bf16.mxu0 0
        %1924 = vmatpush1.bf16.msra.mxu0 %v1907
        %1925 = vmatprep.subr.bf16.mxu0 0
        %1926 = vmatpush1.bf16.msra.mxu0 %v1908
        %1927 = vmatprep.subr.bf16.mxu0 0
        %1928 = vmatpush1.bf16.msra.mxu0 %v1909
        %1929 = vmatprep.subr.bf16.mxu0 0
        %1930 = vmatpush1.bf16.msra.mxu0 %v1910
        %1931 = vmatprep.subr.bf16.mxu0 0
        %1932 = vmatpush1.bf16.msra.mxu0 %v1911
        %1933 = vmatprep.subr.bf16.mxu0 0
        %1934 = vmatpush1.bf16.msra.mxu0 %v1912
        %1935 = vmatprep.subr.bf16.mxu0 0
        %1936 = vmatpush1.bf16.msra.mxu0 %v1913
        %1937 = vmatprep.subr.bf16.mxu0 0
        %1938 = vmatpush1.bf16.msra.mxu0 %v1914
        %1939 = vmatprep.subr.bf16.mxu0 0
        %1940 = vmatpush1.bf16.msra.mxu0 0
        %1941 = vmatprep.subr.bf16.mxu0 0
        %1942 = vmatpush1.bf16.msra.mxu0 0
        %1943 = vmatprep.subr.bf16.mxu0 0
        %1944 = vmatpush1.bf16.msra.mxu0 0
        %1945 = vmatprep.subr.bf16.mxu0 0
        %1946 = vmatpush1.bf16.msra.mxu0 0
        %1947 = vmatprep.subr.bf16.mxu0 0
        %1948 = vmatpush1.bf16.msra.mxu0 0
        %1949 = vmatprep.subr.bf16.mxu0 0
        %1950 = vmatpush1.bf16.msra.mxu0 0
        %1951 = vmatprep.subr.bf16.mxu0 0
        %1952 = vmatpush1.bf16.msra.mxu0 0
        %1953 = vmatprep.subr.bf16.mxu0 0
        %1954 = vmatpush1.bf16.msra.mxu0 0
        %1955 = vmatprep.mubr.bf16.mxu0 0
        %1956 = vmatmul.mubr.bf16.gmra.mrb[0].mxu0 %v1873
        %v1957 = vpop.f32.mrb[0].mxu0
        %v1958 = vadd.f32 0.0, %v1957
        %v1959 = vpop.f32.mrb[0].mxu0
        %v1960 = vpop.f32.mrb[0].mxu0
        %v1961 = vadd.f32 0.0, %v1960
        %v1962 = vpop.f32.mrb[0].mxu0
        %1963 = vdwg.mxu0
        %v1964 = vadd.f32 %v1851, %v1958
        %v1965 = vadd.f32 %v1852, %v1961
        %v1967 = vlaneseq
        %v1968 = vshrl.u32 %v1967, 7
        %v1969 = vsub.s32 0, %v1968
        %v1970 = vrot.slane %v1395, %v1969
        %v1972 = vadd.f32 %v1964, %v1970
        %v1973 = vadd.f32 %v1965, %v1970
        %v1974 = vld [vmem:[#allocation13] sm:$0x1]
        %v1975 = vld [vmem:[#allocation14] sm:$0x1]
        %v1976 = vadd.f32 %v1972, %v1973
        %v1977 = vrot.slane %v1976, 4
        %v1978 = vadd.f32 %v1976, %v1977
        %v1979 = vrot.slane %v1978, 2
        %v1980 = vadd.f32 %v1978, %v1979
        %v1981 = vrot.slane %v1980, 1
        %v1982 = vadd.f32 %v1980, %v1981
        %1983 = vmatprep.subr.mxu0 0.0
        %1984 = vmatpush1.msra.mxu0 %v594
        %1985 = vmatprep.subr.mxu0 0.0
        %1986 = vmatpush1.msra.mxu0 %v595
        %1987 = vmatprep.subr.mxu0 0.0
        %1988 = vmatpush1.msra.mxu0 %v596
        %1989 = vmatprep.subr.mxu0 0.0
        %1990 = vmatpush1.msra.mxu0 %v597
        %1991 = vmatprep.subr.mxu0 0.0
        %1992 = vmatpush1.msra.mxu0 %v598
        %1993 = vmatprep.subr.mxu0 0.0
        %1994 = vmatpush1.msra.mxu0 %v599
        %1995 = vmatprep.subr.mxu0 0.0
        %1996 = vmatpush1.msra.mxu0 %v600
        %1997 = vmatprep.subr.mxu0 0.0
        %1998 = vmatpush1.msra.mxu0 %v601
        %1999 = vmatprep.subr.mxu0 0.0
        %2000 = vmatpush1.msra.mxu0 %v602
        %2001 = vmatprep.subr.mxu0 0.0
        %2002 = vmatpush1.msra.mxu0 %v603
        %2003 = vmatprep.subr.mxu0 0.0
        %2004 = vmatpush1.msra.mxu0 %v604
        %2005 = vmatprep.subr.mxu0 0.0
        %2006 = vmatpush1.msra.mxu0 %v605
        %2007 = vmatprep.subr.mxu0 0.0
        %2008 = vmatpush1.msra.mxu0 %v606
        %2009 = vmatprep.subr.mxu0 0.0
        %2010 = vmatpush1.msra.mxu0 %v607
        %2011 = vmatprep.subr.mxu0 0.0
        %2012 = vmatpush1.msra.mxu0 %v608
        %2013 = vmatprep.subr.mxu0 0.0
        %2014 = vmatpush1.msra.mxu0 %v609
        %2015 = vmatprep.subr.mxu0 0.0
        %2016 = vmatpush1.msra.mxu0 0.0
        %2017 = vmatprep.subr.mxu0 0.0
        %2018 = vmatpush1.msra.mxu0 0.0
        %2019 = vmatprep.subr.mxu0 0.0
        %2020 = vmatpush1.msra.mxu0 0.0
        %2021 = vmatprep.subr.mxu0 0.0
        %2022 = vmatpush1.msra.mxu0 0.0
        %2023 = vmatprep.subr.mxu0 0.0
        %2024 = vmatpush1.msra.mxu0 0.0
        %2025 = vmatprep.subr.mxu0 0.0
        %2026 = vmatpush1.msra.mxu0 0.0
        %2027 = vmatprep.subr.mxu0 0.0
        %2028 = vmatpush1.msra.mxu0 0.0
        %2029 = vmatprep.subr.mxu0 0.0
        %2030 = vmatpush1.msra.mxu0 0.0
        %2031 = vmatprep.subr.mxu0 0.0
        %2032 = vmatpush1.msra.mxu0 0.0
        %2033 = vmatprep.subr.mxu0 0.0
        %2034 = vmatpush1.msra.mxu0 0.0
        %2035 = vmatprep.subr.mxu0 0.0
        %2036 = vmatpush1.msra.mxu0 0.0
        %2037 = vmatprep.subr.mxu0 0.0
        %2038 = vmatpush1.msra.mxu0 0.0
        %2039 = vmatprep.subr.mxu0 0.0
        %2040 = vmatpush1.msra.mxu0 0.0
        %2041 = vmatprep.subr.mxu0 0.0
        %2042 = vmatpush1.msra.mxu0 0.0
        %2043 = vmatprep.subr.mxu0 0.0
        %2044 = vmatpush1.msra.mxu0 0.0
        %2045 = vmatprep.subr.mxu0 0.0
        %2046 = vmatpush1.msra.mxu0 0.0
        %2047 = vmatprep.mubr.f32.mxu0 0.0
        %2048 = vmatmul.mubr.f32.gmra.mrb[0].mxu0 %v1982
        %v2049 = vpop.f32.mrb[0].mxu0
        %v2050 = vadd.f32 0.0, %v2049
        %v2051 = vpop.f32.mrb[0].mxu0
        %2052 = vdwg.mxu0
        %v2053 = vmul.f32 %v2050, 0.03125
        %v2054 = vlaneseq
        %v2055 = vshrl.u32 %v2054, 7
        %v2056 = vsub.s32 0, %v2055
        %v2057 = vrot.slane %v2053, %v2056
        %v2058 = vsub.f32 %v1972, %v2057
        %v2059 = vsub.f32 %v1973, %v2057
        %v2060 = vmul.f32 %v2058, %v2058
        %v2061 = vmul.f32 %v2059, %v2059
        %v2062 = vadd.f32 %v2060, %v2061
        %v2063 = vrot.slane %v2062, 4
        %v2064 = vadd.f32 %v2062, %v2063
        %v2065 = vrot.slane %v2064, 2
        %v2066 = vadd.f32 %v2064, %v2065
        %v2067 = vrot.slane %v2066, 1
        %v2068 = vadd.f32 %v2066, %v2067
        %2069 = vmatprep.subr.mxu0 0.0
        %2070 = vmatpush1.msra.mxu0 %v594
        %2071 = vmatprep.subr.mxu0 0.0
        %2072 = vmatpush1.msra.mxu0 %v595
        %2073 = vmatprep.subr.mxu0 0.0
        %2074 = vmatpush1.msra.mxu0 %v596
        %2075 = vmatprep.subr.mxu0 0.0
        %2076 = vmatpush1.msra.mxu0 %v597
        %2077 = vmatprep.subr.mxu0 0.0
        %2078 = vmatpush1.msra.mxu0 %v598
        %2079 = vmatprep.subr.mxu0 0.0
        %2080 = vmatpush1.msra.mxu0 %v599
        %2081 = vmatprep.subr.mxu0 0.0
        %2082 = vmatpush1.msra.mxu0 %v600
        %2083 = vmatprep.subr.mxu0 0.0
        %2084 = vmatpush1.msra.mxu0 %v601
        %2085 = vmatprep.subr.mxu0 0.0
        %2086 = vmatpush1.msra.mxu0 %v602
        %2087 = vmatprep.subr.mxu0 0.0
        %2088 = vmatpush1.msra.mxu0 %v603
        %2089 = vmatprep.subr.mxu0 0.0
        %2090 = vmatpush1.msra.mxu0 %v604
        %2091 = vmatprep.subr.mxu0 0.0
        %2092 = vmatpush1.msra.mxu0 %v605
        %2093 = vmatprep.subr.mxu0 0.0
        %2094 = vmatpush1.msra.mxu0 %v606
        %2095 = vmatprep.subr.mxu0 0.0
        %2096 = vmatpush1.msra.mxu0 %v607
        %2097 = vmatprep.subr.mxu0 0.0
        %2098 = vmatpush1.msra.mxu0 %v608
        %2099 = vmatprep.subr.mxu0 0.0
        %2100 = vmatpush1.msra.mxu0 %v609
        %2101 = vmatprep.subr.mxu0 0.0
        %2102 = vmatpush1.msra.mxu0 0.0
        %2103 = vmatprep.subr.mxu0 0.0
        %2104 = vmatpush1.msra.mxu0 0.0
        %2105 = vmatprep.subr.mxu0 0.0
        %2106 = vmatpush1.msra.mxu0 0.0
        %2107 = vmatprep.subr.mxu0 0.0
        %2108 = vmatpush1.msra.mxu0 0.0
        %2109 = vmatprep.subr.mxu0 0.0
        %2110 = vmatpush1.msra.mxu0 0.0
        %2111 = vmatprep.subr.mxu0 0.0
        %2112 = vmatpush1.msra.mxu0 0.0
        %2113 = vmatprep.subr.mxu0 0.0
        %2114 = vmatpush1.msra.mxu0 0.0
        %2115 = vmatprep.subr.mxu0 0.0
        %2116 = vmatpush1.msra.mxu0 0.0
        %2117 = vmatprep.subr.mxu0 0.0
        %2118 = vmatpush1.msra.mxu0 0.0
        %2119 = vmatprep.subr.mxu0 0.0
        %2120 = vmatpush1.msra.mxu0 0.0
        %2121 = vmatprep.subr.mxu0 0.0
        %2122 = vmatpush1.msra.mxu0 0.0
        %2123 = vmatprep.subr.mxu0 0.0
        %2124 = vmatpush1.msra.mxu0 0.0
        %2125 = vmatprep.subr.mxu0 0.0
        %2126 = vmatpush1.msra.mxu0 0.0
        %2127 = vmatprep.subr.mxu0 0.0
        %2128 = vmatpush1.msra.mxu0 0.0
        %2129 = vmatprep.subr.mxu0 0.0
        %2130 = vmatpush1.msra.mxu0 0.0
        %2131 = vmatprep.subr.mxu0 0.0
        %2132 = vmatpush1.msra.mxu0 0.0
        %2133 = vmatprep.mubr.f32.mxu0 0.0
        %2134 = vmatmul.mubr.f32.gmra.mrb[0].mxu0 %v2068
        %v2135 = vpop.f32.mrb[0].mxu0
        %v2136 = vadd.f32 0.0, %v2135
        %v2137 = vpop.f32.mrb[0].mxu0
        %2138 = vdwg.mxu0
        %v2139 = vmul.f32 %v2136, 0.03125
        %v2140 = vadd.f32 %v2139, 1e-05
        %v2141 = vrsqrt.pop %v2140
        %v2142 = vlaneseq
        %v2143 = vshrl.u32 %v2142, 7
        %v2144 = vsub.s32 0, %v2143
        %v2145 = vrot.slane %v2141, %v2144
        %v2146 = vmul.f32 %v2058, %v2145
        %v2147 = vmul.f32 %v2059, %v2145
        %v2149 = vlaneseq
        %v2150 = vshrl.u32 %v2149, 7
        %v2151 = vsub.s32 0, %v2150
        %v2152 = vrot.slane %v1974, %v2151
        %v2154 = vmul.f32 %v2146, %v2152
        %v2155 = vmul.f32 %v2147, %v2152
        %v2157 = vlaneseq
        %v2158 = vshrl.u32 %v2157, 7
        %v2159 = vsub.s32 0, %v2158
        %v2160 = vrot.slane %v1975, %v2159
        %v2162 = vadd.f32 %v2154, %v2160
        %v2163 = vadd.f32 %v2155, %v2160
        %v2164 = vmin.f32 %v2162, 20.0
        %v2165 = vmin.f32 %v2163, 20.0
        %v2166 = vmul.f32 %v2164, 1.442695
        %v2167 = vpow.pop %v2166
        %v2168 = vmul.f32 %v2165, 1.442695
        %v2169 = vpow.pop %v2168
        %v2170 = vadd.f32 %v2167, 2.0
        %v2171 = vadd.f32 %v2169, 2.0
        %v2172 = vmul.f32 %v2167, %v2170
        %v2173 = vmul.f32 %v2169, %v2171
        %v2174 = vmul.f32 %v2162, %v2172
        %v2175 = vmul.f32 %v2163, %v2173
        %v2176 = vadd.f32 %v2172, 2.0
        %v2177 = vadd.f32 %v2173, 2.0
        %v2178 = vrcp.pop %v2176
        %v2179 = vrcp.pop %v2177
        %v2180 = vmul.f32 %v2174, %v2178
        %v2181 = vmul.f32 %v2175, %v2179
        %v2182 = vld [vmem:[%s10] sm:$0xf]
        %v2183 = vld [vmem:[%s10 + $0x4] sm:$0xf]
        %v2184 = vld [vmem:[%s10 + $0x8] sm:$0xf]
        %v2185 = vld [vmem:[%s10 + $0xc] sm:$0xf]
        %v2186 = vld [vmem:[%s10 + $0x10] sm:$0xf]
        %v2187 = vld [vmem:[%s10 + $0x14] sm:$0xf]
        %v2188 = vld [vmem:[%s10 + $0x18] sm:$0xf]
        %v2189 = vld [vmem:[%s10 + $0x1c] sm:$0xf]
        %v2190 = vld [vmem:[%s10 + $0x20] sm:$0xf]
        %v2191 = vld [vmem:[%s10 + $0x24] sm:$0xf]
        %v2192 = vld [vmem:[%s10 + $0x28] sm:$0xf]
        %v2193 = vld [vmem:[%s10 + $0x2c] sm:$0xf]
        %v2194 = vld [vmem:[%s10 + $0x30] sm:$0xf]
        %v2195 = vld [vmem:[%s10 + $0x34] sm:$0xf]
        %v2196 = vld [vmem:[%s10 + $0x38] sm:$0xf]
        %v2197 = vld [vmem:[%s10 + $0x3c] sm:$0xf]
        %v2214 = vunpack.c.l.b16 %v2182
        %v2215 = vunpack.c.l.b16 %v2183
        %v2216 = vunpack.c.l.b16 %v2184
        %v2217 = vunpack.c.l.b16 %v2185
        %v2218 = vunpack.c.l.b16 %v2186
        %v2219 = vunpack.c.l.b16 %v2187
        %v2220 = vunpack.c.l.b16 %v2188
        %v2221 = vunpack.c.l.b16 %v2189
        %v2222 = vunpack.c.l.b16 %v2190
        %v2223 = vunpack.c.l.b16 %v2191
        %v2224 = vunpack.c.l.b16 %v2192
        %v2225 = vunpack.c.l.b16 %v2193
        %v2226 = vunpack.c.l.b16 %v2194
        %v2227 = vunpack.c.l.b16 %v2195
        %v2228 = vunpack.c.l.b16 %v2196
        %v2229 = vunpack.c.l.b16 %v2197
        %v2230 = vpack.c.b16 %v2215, %v2214
        %v2231 = vpack.c.b16 %v2217, %v2216
        %v2232 = vpack.c.b16 %v2219, %v2218
        %v2233 = vpack.c.b16 %v2221, %v2220
        %v2234 = vpack.c.b16 %v2223, %v2222
        %v2235 = vpack.c.b16 %v2225, %v2224
        %v2236 = vpack.c.b16 %v2227, %v2226
        %v2237 = vpack.c.b16 %v2229, %v2228
        %2246 = vmatprep.subr.bf16.mxu0 0
        %2247 = vmatpush1.bf16.msra.mxu0 %v2230
        %2248 = vmatprep.subr.bf16.mxu0 0
        %2249 = vmatpush1.bf16.msra.mxu0 %v2231
        %2250 = vmatprep.subr.bf16.mxu0 0
        %2251 = vmatpush1.bf16.msra.mxu0 %v2232
        %2252 = vmatprep.subr.bf16.mxu0 0
        %2253 = vmatpush1.bf16.msra.mxu0 %v2233
        %2254 = vmatprep.subr.bf16.mxu0 0
        %2255 = vmatpush1.bf16.msra.mxu0 %v2234
        %2256 = vmatprep.subr.bf16.mxu0 0
        %2257 = vmatpush1.bf16.msra.mxu0 %v2235
        %2258 = vmatprep.subr.bf16.mxu0 0
        %2259 = vmatpush1.bf16.msra.mxu0 %v2236
        %2260 = vmatprep.subr.bf16.mxu0 0
        %2261 = vmatpush1.bf16.msra.mxu0 %v2237
        %2262 = vmatprep.subr.bf16.mxu0 0
        %2263 = vmatpush1.bf16.msra.mxu0 0
        %2264 = vmatprep.subr.bf16.mxu0 0
        %2265 = vmatpush1.bf16.msra.mxu0 0
        %2266 = vmatprep.subr.bf16.mxu0 0
        %2267 = vmatpush1.bf16.msra.mxu0 0
        %2268 = vmatprep.subr.bf16.mxu0 0
        %2269 = vmatpush1.bf16.msra.mxu0 0
        %2270 = vmatprep.subr.bf16.mxu0 0
        %2271 = vmatpush1.bf16.msra.mxu0 0
        %2272 = vmatprep.subr.bf16.mxu0 0
        %2273 = vmatpush1.bf16.msra.mxu0 0
        %2274 = vmatprep.subr.bf16.mxu0 0
        %2275 = vmatpush1.bf16.msra.mxu0 0
        %2276 = vmatprep.subr.bf16.mxu0 0
        %2277 = vmatpush1.bf16.msra.mxu0 0
        %2278 = vmatprep.mubr.bf16.mxu0 0
        %2279 = vmatmul.mubr.bf16.gmra.mrb[0].mxu0 %v830
        %v2280 = vpop.f32.mrb[0].mxu0
        %v2281 = vadd.f32 0.0, %v2280
        %v2282 = vpop.f32.mrb[0].mxu0
        %v2283 = vpop.f32.mrb[0].mxu0
        %v2284 = vadd.f32 0.0, %v2283
        %v2285 = vpop.f32.mrb[0].mxu0
        %2286 = vdwg.mxu0
        %v2287 = vadd.f32 %v2180, %v2281
        %v2288 = vadd.f32 %v2181, %v2284
        %v2289 = vld [vmem:[#allocation16] sm:$0x1]
        %v2291 = vlaneseq
        %v2292 = vshrl.u32 %v2291, 7
        %v2293 = vsub.s32 0, %v2292
        %v2294 = vrot.slane %v2289, %v2293
        %v2296 = vadd.f32 %v2287, %v2294
        %v2297 = vadd.f32 %v2288, %v2294
        %2298 = vst [vmem:[%s571] sm:$0xff] %v2296
        %2299 = vst [vmem:[%s571 + $0x8] sm:$0xff] %v2297
        %s2300 = sand.u32 %s325, 1
        %s2301 = scalar_lea.sflag [#allocation4], %s2300
        %s2302 = sand.u32 %s325, 1
        %s2303 = smul.addr %s2302, 16
        %s2304 = scalar_lea.vmem [#allocation17], %s2303
        // Predicated region
        $region109: #{tpu_custom_call.1} parent=71 // pred_check
          %p2305 = pneg %p335
        $region110: #{tpu_custom_call.1} parent=71 // pred_check_branch
          %2307 = sbr.rel (%p2305) target = $region112
        $region111: #{tpu_custom_call.1} parent=71 // pred_region
          %s2309 = ssub.s32 256, 256
          %2310 = vsyncadd %s2301, %s2309
          %s2311 = smul.addr %s34, 2
          %s2312 = smul.addr %s2311, 128
          %s2313 = scalar_lea.hbm %s13, %s2312
          %s2314 = sshll.u32 %s2304, 4
          %s2315 = int_to_ptr.vmem [resolvable:$true] %s2314
          %2320 = dma.vmem_to_hbm [thread:$0]  %s2315, 256, %s2313, %s2301, 128, 128, 8
        $region112: #{tpu_custom_call.1} parent=71 // pred_fallthru
          _
      $region72: #{tpu_custom_call.1} parent=5 // pred_fallthru
        _
      %p2321 = scmp.le.s32.totalorder 2, %s29
      // Predicated region
      $region113: #{tpu_custom_call.1} parent=5 // pred_check
        %p2322 = pneg %p2321
      $region114: #{tpu_custom_call.1} parent=5 // pred_check_branch
        %2324 = sbr.rel (%p2322) target = $region116
      $region115: #{tpu_custom_call.1} parent=5 // pred_region
        %s2325 = ssub.s32 %s29, 2
        // Predicated region
        $region117: #{tpu_custom_call.1} parent=115 // pred_check
          %p2326 = pneg %p341
        $region118: #{tpu_custom_call.1} parent=115 // pred_check_branch
          %2328 = sbr.rel (%p2326) target = $region120
        $region119: #{tpu_custom_call.1} parent=115 // pred_region
          %s2329 = sand.u32 %s326, 1
          %s2330 = scalar_lea.sflag [#allocation4], %s2329
          %s2331 = sand.u32 %s326, 1
          %s2332 = smul.addr %s2331, 16
          %s2333 = scalar_lea.vmem [#allocation17], %s2332
          %2334 = dma.done %s2330, 256
        $region120: #{tpu_custom_call.1} parent=115 // pred_fallthru
          _
      $region116: #{tpu_custom_call.1} parent=5 // pred_fallthru
        _
    $region6: #{tpu_custom_call.1} parent=1 // loop_footer
      %s33 = sadd.s32 1, %s29
    $region7: #{tpu_custom_call.1} parent=1 // loop_footer_branch
      %28 = sbr.rel target = $region3
    $region8: #{tpu_custom_call.1} parent=1 // loop_exit
      _
    %2335 = vsyncpa [#allocation3], 1
    %s2336 = scalar_lea.sflag [#allocation3], 1
    %2337 = vsyncpa %s2336, 1
    %2338 = vsyncpa [#allocation6], 1
    %2339 = vsyncpa [#allocation9], 1
    %2340 = vsyncpa [#allocation12], 1
    %2341 = vsyncpa [#allocation15], 1
    %2342 = vsyncpa [#allocation4], 1
    %s2343 = scalar_lea.sflag [#allocation4], 1
    %2344 = vsyncpa %s2343, 1

</llo_original>
